<compile_context>
chip_gen: v7x
topology: tpu7x:2x2x1
jax: 0.10.0
libtpu: 0.0.40
codegen_flags: <defaults>
</compile_context>

<pallas_src>
import functools

import jax
import jax.numpy as jnp
from jax.experimental import pallas as pl
from jax.experimental.pallas import tpu as pltpu


def _round_up(x, m):
    return ((x + m - 1) // m) * m


def _pad2d(x, rows, cols):
    r, c = x.shape
    return jnp.pad(x, ((0, rows - r), (0, cols - c)))


# ----------------------------- Fused Pallas kernel ---------------------------

def _fused_stage_kernel(*refs, num_layers, hp):
    proj_ref, extras_ref, adj_ref, wb_ref, bb_ref = refs[:5]
    layer_refs = refs[5:5 + 2 * num_layers]
    wsem_ref, bsem_ref, out_sem_ref, out_feats_ref, feat_ref = refs[5 + 2 * num_layers:]

    cdt = jnp.bfloat16  # MXU operand dtype; accumulation is f32.

    # Resident bf16 feature buffer (one mesh), lane-aligned layout:
    #   [ h slot: hp lanes | pos(3) tex(C) prev(...) starting at lane hp | 0-pad ]
    # extras_ref already carries pos/tex/prev at their final lane offsets and
    # zeros elsewhere, so one full-width copy initializes it.
    feat_ref[...] = extras_ref[...]

    # Bottleneck linear + ReLU (bf16 operands, f32 accumulate).
    bneck = jnp.dot(proj_ref[...], wb_ref[...], preferred_element_type=jnp.float32)
    bneck = jnp.maximum(bneck + bb_ref[...], 0.0)
    feat_ref[:, pl.ds(0, hp)] = bneck.astype(cdt)   # lane-aligned, unmasked store

    adj = adj_ref[...]

    h = None
    for l in range(num_layers):
        w01 = layer_refs[2 * l][...]        # (DP, 2*hp): fused [w0 | w1], zero-padded rows/cols
        b01 = layer_refs[2 * l + 1][...]    # (1, 2*hp) f32
        x = feat_ref[...]                   # already bf16 -> no per-layer convert
        # One MXU pass over the K dim produces both h0 and h1.
        h01 = jnp.dot(x, w01, preferred_element_type=jnp.float32) + b01
        h0 = h01[:, :hp]                    # vreg-aligned slices
        h1 = h01[:, hp:]
        # pytorch3d undirected gather_scatter == per-mesh dense-adjacency matmul
        # (bias b1 is inside h1, so it is correctly degree-weighted).
        neigh = jnp.dot(adj, h1.astype(cdt), preferred_element_type=jnp.float32)
        h = jnp.maximum(h0 + neigh, 0.0)    # padded lanes are exactly zero
        feat_ref[:, pl.ds(0, hp)] = h.astype(cdt)

    # Final vert_semantic linear; 128-lane-dense output block, unmasked stores.
    sem = jnp.dot(feat_ref[...], wsem_ref[...], preferred_element_type=jnp.float32)
    out_sem_ref[...] = sem + bsem_ref[...]
    out_feats_ref[...] = h                  # single full-width store of [h | 0-pad]


def _repack_rows(w, hidden, hp, dp):
    """Move weight rows from the [h(hidden) | extras(e)] ordering to the
    lane-aligned feature layout: h rows at [0, hidden), extras rows at [hp, hp+e)."""
    e = w.shape[0] - hidden
    out = jnp.zeros((dp, w.shape[1]), w.dtype)
    out = out.at[:hidden, :].set(w[:hidden])
    if e > 0:
        out = out.at[hp:hp + e, :].set(w[hidden:])
    return out


def _vmem_limit_bytes():
    # Per-generation VMEM limit with ~25% headroom for Mosaic internal scratch.
    try:
        cap = pltpu.get_tpu_info().vmem_capacity_bytes
    except Exception:
        cap = 64 * 1024 * 1024
    return int(cap * 3 // 4)


def fused_refinement_stack(proj_feats, extras, adj, params, *, num_classes):
    """bottleneck -> GraphConv stack -> vert_semantic, fused in one Pallas kernel
    with a per-mesh "parallel" grid axis.

    proj_feats: (N*V, img_feat_dim) vert-aligned image features
    extras:     (N*V, E) = [pos(3) | tex(num_classes) | optional prev feats]
    adj:        (N, V, V) per-mesh dense undirected adjacency (block-diagonal in
                packed indexing since edges never cross meshes)
    Returns (sem_logits (N*V, num_classes) f32, last_gconv_feats (N*V, hidden) f32).
    """
    num_layers = len(params["gconvs"])
    assert num_layers >= 1
    hidden = params["bottleneck_w"].shape[1]

    n_meshes, v, _ = adj.shape
    vv, f_in = proj_feats.shape
    assert vv == n_meshes * v
    e_w = extras.shape[1]

    HP = _round_up(hidden, 128)          # lane-aligned hidden slot / h0,h1 width
    FP = _round_up(f_in, 128)
    CP = _round_up(num_classes, 128)     # lane-dense semantic output
    DP = _round_up(HP + e_w, 128)        # resident-feature width / shared K dim
    VP = _round_up(v, 8)                 # per-mesh vertex rows (sublane aligned)

    bf16 = jnp.bfloat16
    f32 = jnp.float32

    # Per-mesh batched inputs (grid axis first).
    proj_3d = jnp.pad(proj_feats.astype(bf16).reshape(n_meshes, v, f_in),
                      ((0, 0), (0, VP - v), (0, FP - f_in)))
    extras_3d = jnp.pad(extras.astype(bf16).reshape(n_meshes, v, e_w),
                        ((0, 0), (0, VP - v), (HP, DP - HP - e_w)))
    # Small integer edge counts are exact in bf16 (valid while multiplicity <= 256).
    # TODO(synk): on v7x, fp8(e4m3) adjacency would halve adj VMEM/HBM traffic.
    adj_3d = jnp.pad(adj.astype(bf16), ((0, 0), (0, VP - v), (0, VP - v)))

    ins = [proj_3d, extras_3d, adj_3d,
           _pad2d(params["bottleneck_w"].astype(bf16), FP, HP),
           _pad2d(params["bottleneck_b"].astype(f32).reshape(1, -1), 1, HP)]
    in_specs = [
        pl.BlockSpec((None, VP, FP), lambda n: (n, 0, 0)),
        pl.BlockSpec((None, VP, DP), lambda n: (n, 0, 0)),
        pl.BlockSpec((None, VP, VP), lambda n: (n, 0, 0)),
        pl.BlockSpec((FP, HP), lambda n: (0, 0)),
        pl.BlockSpec((1, HP), lambda n: (0, 0)),
    ]
    for g in params["gconvs"]:
        w0p = _pad2d(_repack_rows(g["w0"].astype(f32), hidden, HP, DP), DP, HP)
        w1p = _pad2d(_repack_rows(g["w1"].astype(f32), hidden, HP, DP), DP, HP)
        b0p = _pad2d(g["b0"].astype(f32).reshape(1, -1), 1, HP)
        b1p = _pad2d(g["b1"].astype(f32).reshape(1, -1), 1, HP)
        ins.append(jnp.concatenate([w0p, w1p], axis=1).astype(bf16))   # (DP, 2*HP)
        ins.append(jnp.concatenate([b0p, b1p], axis=1))                # (1, 2*HP) f32
        in_specs.append(pl.BlockSpec((DP, 2 * HP), lambda n: (0, 0)))
        in_specs.append(pl.BlockSpec((1, 2 * HP), lambda n: (0, 0)))
    ins.append(_pad2d(_repack_rows(params["vert_sem_w"].astype(f32), hidden, HP, DP),
                      DP, CP).astype(bf16))
    ins.append(_pad2d(params["vert_sem_b"].astype(f32).reshape(1, -1), 1, CP))
    in_specs.append(pl.BlockSpec((DP, CP), lambda n: (0, 0)))
    in_specs.append(pl.BlockSpec((1, CP), lambda n: (0, 0)))

    flops = 2 * n_meshes * VP * (FP * HP
                                 + num_layers * (DP * 2 * HP + VP * HP)
                                 + DP * CP)
    bytes_accessed = (sum(int(a.size) * a.dtype.itemsize for a in ins)
                      + n_meshes * VP * (CP + HP) * 4)

    # TODO(synk): for very large meshes, stream adj column-blocks through a
    # double-buffered emit_pipeline (or a scalar-prefetch CSR gather-scatter)
    # instead of keeping the whole per-mesh dense adjacency VMEM-resident.
    out_sem_p, out_feats_p = pl.pallas_call(
        functools.partial(_fused_stage_kernel, num_layers=num_layers, hp=HP),
        out_shape=(jax.ShapeDtypeStruct((n_meshes, VP, CP), f32),
                   jax.ShapeDtypeStruct((n_meshes, VP, HP), f32)),
        grid_spec=pltpu.PrefetchScalarGridSpec(
            num_scalar_prefetch=0,
            grid=(n_meshes,),
            in_specs=in_specs,
            out_specs=(pl.BlockSpec((None, VP, CP), lambda n: (n, 0, 0)),
                       pl.BlockSpec((None, VP, HP), lambda n: (n, 0, 0))),
            scratch_shapes=[pltpu.VMEM((VP, DP), bf16)]),
        compiler_params=pltpu.CompilerParams(
            dimension_semantics=("parallel",),
            vmem_limit_bytes=_vmem_limit_bytes()),
        cost_estimate=pl.CostEstimate(flops=int(flops), transcendentals=0,
                                      bytes_accessed=int(bytes_accessed)),
    )(*ins)

    sem = out_sem_p[:, :v, :num_classes].reshape(vv, num_classes)
    feats = out_feats_p[:, :v, :hidden].reshape(vv, hidden)
    return sem, feats


# Pure-JAX reference of the same stack (f32), used only for the correctness check.
def reference_stack(proj_feats, extras, adj, params, *, num_classes):
    hidden = params["bottleneck_w"].shape[1]
    x = jnp.maximum(proj_feats @ params["bottleneck_w"] + params["bottleneck_b"], 0.0)
    feats = jnp.concatenate([x, extras], axis=1)
    pt = extras[:, :3 + num_classes]
    h = None
    for g in params["gconvs"]:
        h0 = feats @ g["w0"] + g["b0"]
        h1 = feats @ g["w1"] + g["b1"]
        h = jnp.maximum(h0 + adj @ h1, 0.0)
        feats = jnp.concatenate([h, pt], axis=1)
    sem = feats @ params["vert_sem_w"] + params["vert_sem_b"]
    return sem, h


# --------------------------------- Glue --------------------------------------

def padded_to_packed(x, idx):
    """x: (N, V, D), idx: (VV,) -> (VV, D)."""
    d = x.shape[-1]
    return x.reshape(-1, d)[idx]


def project_verts(verts, P, eps=0.1):
    """verts: (N, V, 3), P: (N, 4, 4) -> (N, V, 3)."""
    n, v, _ = verts.shape
    ones = jnp.ones((n, v, 1), verts.dtype)
    verts_hom = jnp.concatenate([verts, ones], axis=2)           # (N, V, 4)
    verts_cam_hom = jnp.einsum("nvk,nmk->nvm", verts_hom, P)     # verts_hom @ P^T
    w = verts_cam_hom[:, :, 2:3]
    w_sign = jnp.where(w == 0, jnp.ones_like(w), jnp.sign(w))
    w = w_sign * jnp.maximum(jnp.abs(w), eps)
    return verts_cam_hom[:, :, :3] / w


def vert_align(feats, verts):
    """pytorch3d.ops.vert_align: bilinear grid_sample, padding_mode='zeros',
    align_corners=True.  feats: (N, C, H, W), verts: (N, V, 3) -> (N, V, C).
    # TODO(synk): data-dependent bilinear gather kept in plain JAX (no clean
    # rectangular-BlockSpec Pallas equivalent for this gather pattern).
    """
    n, c, h, w = feats.shape
    x = verts[..., 0]
    y = verts[..., 1]
    xp = (x + 1.0) * 0.5 * (w - 1)   # align_corners=True unnormalization
    yp = (y + 1.0) * 0.5 * (h - 1)
    x0 = jnp.floor(xp)
    y0 = jnp.floor(yp)
    x1 = x0 + 1.0
    y1 = y0 + 1.0
    wx1 = xp - x0
    wx0 = 1.0 - wx1
    wy1 = yp - y0
    wy0 = 1.0 - wy1

    flat = feats.reshape(n, c, h * w)

    def tap(ix, iy):
        valid = (ix >= 0) & (ix <= w - 1) & (iy >= 0) & (iy <= h - 1)
        ixc = jnp.clip(ix, 0, w - 1).astype(jnp.int32)
        iyc = jnp.clip(iy, 0, h - 1).astype(jnp.int32)
        idx = iyc * w + ixc                                        # (N, V)
        vals = jnp.take_along_axis(flat, idx[:, None, :], axis=2)  # (N, C, V)
        return jnp.where(valid[:, None, :], vals, 0.0)

    out = (tap(x0, y0) * (wx0 * wy0)[:, None, :]
           + tap(x1, y0) * (wx1 * wy0)[:, None, :]
           + tap(x0, y1) * (wx0 * wy1)[:, None, :]
           + tap(x1, y1) * (wx1 * wy1)[:, None, :])                # (N, C, V)
    return jnp.transpose(out, (0, 2, 1))                           # (N, V, C)


def edges_to_mesh_adjacency(edges, n_meshes, v):
    """Undirected gather_scatter as a per-mesh (N, V, V) adjacency (with
    multiplicity).  Edges are in packed (global) indexing and never cross
    meshes, so the packed adjacency is block-diagonal."""
    mesh_id = edges[:, 0] // v
    e0 = edges[:, 0] % v
    e1 = edges[:, 1] % v
    adj = jnp.zeros((n_meshes, v, v), jnp.float32)
    adj = adj.at[mesh_id, e0, e1].add(1.0)
    adj = adj.at[mesh_id, e1, e0].add(1.0)
    # NOTE: values are exact in bf16 while per-edge multiplicity stays <= 256.
    return adj


def edges_to_dense_adjacency(edges, vv):
    """Packed dense (VV, VV) adjacency; used only by the pure-JAX reference."""
    adj = jnp.zeros((vv, vv), jnp.float32)
    adj = adj.at[edges[:, 0], edges[:, 1]].add(1.0)
    adj = adj.at[edges[:, 1], edges[:, 0]].add(1.0)
    return adj


# ------------------------------ Parameters -----------------------------------

def init_params(key, img_feat_dim, vert_feat_dim, hidden_dim, num_classes, stage_depth):
    keys = jax.random.split(key, 1 + 2 * stage_depth)
    params = {
        # nn.init.normal_(std=0.01), bias = 0
        "bottleneck_w": 0.01 * jax.random.normal(keys[0], (img_feat_dim, hidden_dim), jnp.float32),
        "bottleneck_b": jnp.zeros((hidden_dim,), jnp.float32),
        # nn.init.zeros_ on vert_semantic
        "vert_sem_w": jnp.zeros((hidden_dim + 3 + num_classes, num_classes), jnp.float32),
        "vert_sem_b": jnp.zeros((num_classes,), jnp.float32),
        "gconvs": [],
    }
    for i in range(stage_depth):
        din = (hidden_dim + vert_feat_dim + 3 + num_classes) if i == 0 else (hidden_dim + 3 + num_classes)
        params["gconvs"].append({
            "w0": 0.01 * jax.random.normal(keys[1 + 2 * i], (din, hidden_dim), jnp.float32),
            "b0": jnp.zeros((hidden_dim,), jnp.float32),
            "w1": 0.01 * jax.random.normal(keys[2 + 2 * i], (din, hidden_dim), jnp.float32),
            "b1": jnp.zeros((hidden_dim,), jnp.float32),
        })
    return params


# -------------------------------- Forward -------------------------------------

def mesh_sem_refinement_stage_forward(
    params, img_feats, verts_padded, edges_packed, sem_2d, P,
    num_vertices, num_classes,
    vert_feats_prev=None, vert_sem_feats_prev=None, sem_residual=True,
    use_pallas=True,
):
    n, v, _ = verts_padded.shape
    vv = n * v
    # all meshes have `num_vertices` verts -> padded_to_packed idx is arange
    idx = jnp.arange(vv, dtype=jnp.int32)

    # project_verts and vert_align(sem_2d, ...) are each computed twice in the
    # torch module with identical inputs -> computed once here (hand-CSE).
    vert_pos_padded = project_verts(verts_padded, P)
    vert_pos_packed = padded_to_packed(verts_padded, idx)          # unprojected, as in torch

    vert_align_sem = vert_align(sem_2d, vert_pos_padded)           # (N, V, num_classes)
    textures_packed = vert_align_sem.reshape(vv, num_classes)      # TexturesVertex.verts_features_packed()

    vert_align_img = padded_to_packed(vert_align(img_feats, vert_pos_padded), idx)

    extras_list = [vert_pos_packed, textures_packed]
    if vert_feats_prev is not None:
        extras_list.append(vert_feats_prev)
    if vert_sem_feats_prev is not None:
        extras_list.append(vert_sem_feats_prev)
    extras = jnp.concatenate(extras_list, axis=1)

    if use_pallas:
        adj = edges_to_mesh_adjacency(edges_packed, n, num_vertices)   # (N, V, V)
        sem_packed, vert_sem_feats_nopos = fused_refinement_stack(
            vert_align_img, extras, adj, params, num_classes=num_classes)
    else:
        adj = edges_to_dense_adjacency(edges_packed, vv)               # (VV, VV)
        sem_packed, vert_sem_feats_nopos = reference_stack(
            vert_align_img, extras, adj, params, num_classes=num_classes)

    meshes_textures = sem_packed.reshape(-1, num_vertices, num_classes)
    textures_out = vert_align_sem + meshes_textures if sem_residual else meshes_textures

    vert_feats_nopos = None
    return textures_out, vert_feats_nopos, vert_sem_feats_nopos


# ---------------------------------- Main ---------------------------------------

if __name__ == "__main__":
    N = 2
    NUM_VERTICES = 64
    IMG_FEAT_DIM = 32
    VERT_FEAT_DIM = 0
    HIDDEN_DIM = 32
    NUM_CLASSES = 4
    STAGE_DEPTH = 2
    HW = 16

    key = jax.random.PRNGKey(0)
    k_param, k_verts, k_img, k_sem, k_p = jax.random.split(key, 5)

    params = init_params(k_param, IMG_FEAT_DIM, VERT_FEAT_DIM, HIDDEN_DIM,
                         NUM_CLASSES, STAGE_DEPTH)

    verts_padded = jax.random.uniform(k_verts, (N, NUM_VERTICES, 3),
                                      dtype=jnp.float32, minval=-1.0, maxval=1.0)
    img_feats = jax.random.normal(k_img, (N, IMG_FEAT_DIM, HW, HW), jnp.float32)
    sem_2d = jax.random.normal(k_sem, (N, NUM_CLASSES, HW, HW), jnp.float32)
    P = (jnp.tile(jnp.eye(4, dtype=jnp.float32)[None], (N, 1, 1))
         + 0.1 * jax.random.normal(k_p, (N, 4, 4), jnp.float32))

    # Ring-graph edges per mesh, in packed (global) vertex indexing.
    base = jnp.arange(NUM_VERTICES, dtype=jnp.int32)
    edges_list = [jnp.stack([base + i * NUM_VERTICES,
                             (base + 1) % NUM_VERTICES + i * NUM_VERTICES], axis=1)
                  for i in range(N)]
    edges_packed = jnp.concatenate(edges_list, axis=0)              # (N*V, 2)

    forward = jax.jit(
        mesh_sem_refinement_stage_forward,
        static_argnames=("num_vertices", "num_classes", "sem_residual", "use_pallas"))

    tex, _, sem_feats = forward(params, img_feats, verts_padded, edges_packed,
                                sem_2d, P, num_vertices=NUM_VERTICES,
                                num_classes=NUM_CLASSES, use_pallas=True)
    jax.block_until_ready(tex)
    jax.block_until_ready(sem_feats)

    # Pure-JAX f32 reference (same glue, jnp matmuls instead of the fused kernel).
    tex_ref, _, sem_ref = forward(params, img_feats, verts_padded, edges_packed,
                                  sem_2d, P, num_vertices=NUM_VERTICES,
                                  num_classes=NUM_CLASSES, use_pallas=False)

    assert tex.shape == (N, NUM_VERTICES, NUM_CLASSES)
    assert sem_feats.shape == (N * NUM_VERTICES, HIDDEN_DIM)
    # bf16 matmul operands with f32 accumulation -> slightly looser tolerances.
    assert jnp.allclose(tex, tex_ref, atol=5e-3, rtol=5e-2)
    assert jnp.allclose(sem_feats, sem_ref, atol=5e-3, rtol=5e-2)

    print("KERNEL_OK")
</pallas_src>

<mosaic_0001>
module attributes {stable_mosaic.version = 11 : i64} {
  func.func private @main(%arg0: i32) attributes {dimension_semantics = [#tpu.dimension_semantics<core_parallel>], iteration_bounds = array<i64: 2>, tpu.core_type = #tpu.core_type<sc_scalar_subcore>, window_params = []} {
    return
  }
}

module attributes {stable_mosaic.version = 11 : i64} {
  func.func private @main(%arg0: i32) attributes {dimension_semantics = [#tpu.dimension_semantics<core_parallel>], iteration_bounds = array<i64: 2>, tpu.core_type = #tpu.core_type<sc_scalar_subcore>, window_params = []} {
    return
  }
}

module attributes {stable_mosaic.version = 11 : i64} {
  func.func @_fused_stage_kernel(%arg0: i32, %arg1: memref<1x64x128xbf16, #tpu.memory_space<vmem>>, %arg2: memref<1x64x256xbf16, #tpu.memory_space<vmem>>, %arg3: memref<1x64x64xbf16, #tpu.memory_space<vmem>>, %arg4: memref<128x128xbf16, #tpu.memory_space<vmem>>, %arg5: memref<1x128xf32, #tpu.memory_space<vmem>>, %arg6: memref<256x256xbf16, #tpu.memory_space<vmem>>, %arg7: memref<1x256xf32, #tpu.memory_space<vmem>>, %arg8: memref<256x256xbf16, #tpu.memory_space<vmem>>, %arg9: memref<1x256xf32, #tpu.memory_space<vmem>>, %arg10: memref<256x128xbf16, #tpu.memory_space<vmem>>, %arg11: memref<1x128xf32, #tpu.memory_space<vmem>>, %arg12: memref<1x64x128xf32, #tpu.memory_space<vmem>>, %arg13: memref<1x64x128xf32, #tpu.memory_space<vmem>>, %arg14: memref<64x256xbf16, #tpu.memory_space<vmem>>) attributes {dimension_semantics = [#tpu.dimension_semantics<parallel>], iteration_bounds = array<i64: 2>, scalar_prefetch = 0 : i64, scratch_operands = 1 : i64, tpu.core_type = #tpu.core_type<tc>, window_params = [{transform_indices = @transform_0, window_bounds = array<i64: 1, 64, 128>}, {transform_indices = @transform_1, window_bounds = array<i64: 1, 64, 256>}, {transform_indices = @transform_2, window_bounds = array<i64: 1, 64, 64>}, {pipeline_mode = #tpu.pipeline_mode<synchronous>, transform_indices = @transform_3, window_bounds = array<i64: 128, 128>}, {pipeline_mode = #tpu.pipeline_mode<synchronous>, transform_indices = @transform_4, window_bounds = array<i64: 1, 128>}, {pipeline_mode = #tpu.pipeline_mode<synchronous>, transform_indices = @transform_5, window_bounds = array<i64: 256, 256>}, {pipeline_mode = #tpu.pipeline_mode<synchronous>, transform_indices = @transform_6, window_bounds = array<i64: 1, 256>}, {pipeline_mode = #tpu.pipeline_mode<synchronous>, transform_indices = @transform_7, window_bounds = array<i64: 256, 256>}, {pipeline_mode = #tpu.pipeline_mode<synchronous>, transform_indices = @transform_8, window_bounds = array<i64: 1, 256>}, {pipeline_mode = #tpu.pipeline_mode<synchronous>, transform_indices = @transform_9, window_bounds = array<i64: 256, 128>}, {pipeline_mode = #tpu.pipeline_mode<synchronous>, transform_indices = @transform_10, window_bounds = array<i64: 1, 128>}, {transform_indices = @transform_11, window_bounds = array<i64: 1, 64, 128>}, {transform_indices = @transform_12, window_bounds = array<i64: 1, 64, 128>}]} {
    %c0 = arith.constant 0 : index
    %c0_0 = arith.constant 0 : index
    %c0_1 = arith.constant 0 : index
    %0 = vector.load %arg2[%c0, %c0_0, %c0_1] : memref<1x64x256xbf16, #tpu.memory_space<vmem>>, vector<1x64x256xbf16>
    %1 = vector.shape_cast %0 : vector<1x64x256xbf16> to vector<64x256xbf16>
    %c0_2 = arith.constant 0 : index
    %c0_3 = arith.constant 0 : index
    %2 = vector.load %arg14[%c0_2, %c0_3] : memref<64x256xbf16, #tpu.memory_space<vmem>>, vector<64x256xbf16>
    tpu.vector_store %arg14[%c0_2, %c0_3], %1 {strides = array<i32>} : memref<64x256xbf16, #tpu.memory_space<vmem>>, vector<64x256xbf16>,
    %c0_4 = arith.constant 0 : index
    %c0_5 = arith.constant 0 : index
    %c0_6 = arith.constant 0 : index
    %3 = vector.load %arg1[%c0_4, %c0_5, %c0_6] : memref<1x64x128xbf16, #tpu.memory_space<vmem>>, vector<1x64x128xbf16>
    %4 = vector.shape_cast %3 : vector<1x64x128xbf16> to vector<64x128xbf16>
    %c0_7 = arith.constant 0 : index
    %c0_8 = arith.constant 0 : index
    %5 = vector.load %arg4[%c0_7, %c0_8] : memref<128x128xbf16, #tpu.memory_space<vmem>>, vector<128x128xbf16>
    %cst = arith.constant dense<0.000000e+00> : vector<64x128xf32>
    %6 = tpu.matmul %4, %5, %cst {dimension_numbers = #tpu.dot_dimension_numbers<[1], [0], [0], [1], [0, 0, 1, 1], [], []>} : vector<64x128xbf16>, vector<128x128xbf16>, vector<64x128xf32> -> vector<64x128xf32>
    %c0_9 = arith.constant 0 : index
    %c0_10 = arith.constant 0 : index
    %7 = vector.load %arg5[%c0_9, %c0_10] : memref<1x128xf32, #tpu.memory_space<vmem>>, vector<1x128xf32>
    %8 = vector.broadcast %7 : vector<1x128xf32> to vector<64x128xf32>
    %9 = arith.addf %6, %8 : vector<64x128xf32>
    %cst_11 = arith.constant 0.000000e+00 : f32
    %10 = vector.broadcast %cst_11 : f32 to vector<64x128xf32>
    %11 = arith.maximumf %9, %10 : vector<64x128xf32>
    %12 = arith.truncf %11 : vector<64x128xf32> to vector<64x128xbf16>
    %c0_12 = arith.constant 0 : index
    %c0_13 = arith.constant 0 : index
    %13 = vector.load %arg14[%c0_12, %c0_13] : memref<64x256xbf16, #tpu.memory_space<vmem>>, vector<64x128xbf16>
    tpu.vector_store %arg14[%c0_12, %c0_13], %12 {strides = array<i32>} : memref<64x256xbf16, #tpu.memory_space<vmem>>, vector<64x128xbf16>,
    %c0_14 = arith.constant 0 : index
    %c0_15 = arith.constant 0 : index
    %c0_16 = arith.constant 0 : index
    %14 = vector.load %arg3[%c0_14, %c0_15, %c0_16] : memref<1x64x64xbf16, #tpu.memory_space<vmem>>, vector<1x64x64xbf16>
    %15 = vector.shape_cast %14 : vector<1x64x64xbf16> to vector<64x64xbf16>
    %c0_17 = arith.constant 0 : index
    %c0_18 = arith.constant 0 : index
    %16 = vector.load %arg6[%c0_17, %c0_18] : memref<256x256xbf16, #tpu.memory_space<vmem>>, vector<256x256xbf16>
    %c0_19 = arith.constant 0 : index
    %c0_20 = arith.constant 0 : index
    %17 = vector.load %arg7[%c0_19, %c0_20] : memref<1x256xf32, #tpu.memory_space<vmem>>, vector<1x256xf32>
    %c0_21 = arith.constant 0 : index
    %c0_22 = arith.constant 0 : index
    %18 = vector.load %arg14[%c0_21, %c0_22] : memref<64x256xbf16, #tpu.memory_space<vmem>>, vector<64x256xbf16>
    %cst_23 = arith.constant dense<0.000000e+00> : vector<64x256xf32>
    %19 = tpu.matmul %18, %16, %cst_23 {dimension_numbers = #tpu.dot_dimension_numbers<[1], [0], [0], [1], [0, 0, 1, 1], [], []>} : vector<64x256xbf16>, vector<256x256xbf16>, vector<64x256xf32> -> vector<64x256xf32>
    %20 = vector.broadcast %17 : vector<1x256xf32> to vector<64x256xf32>
    %21 = arith.addf %19, %20 : vector<64x256xf32>
    %22 = vector.extract_strided_slice %21 {offsets = [0, 0], sizes = [64, 128], strides = [1, 1]} : vector<64x256xf32> to vector<64x128xf32>
    %23 = vector.extract_strided_slice %21 {offsets = [0, 128], sizes = [64, 128], strides = [1, 1]} : vector<64x256xf32> to vector<64x128xf32>
    %24 = arith.truncf %23 : vector<64x128xf32> to vector<64x128xbf16>
    %cst_24 = arith.constant dense<0.000000e+00> : vector<64x128xf32>
    %25 = tpu.matmul %15, %24, %cst_24 {dimension_numbers = #tpu.dot_dimension_numbers<[1], [0], [0], [1], [0, 0, 1, 1], [], []>} : vector<64x64xbf16>, vector<64x128xbf16>, vector<64x128xf32> -> vector<64x128xf32>
    %26 = arith.addf %22, %25 : vector<64x128xf32>
    %cst_25 = arith.constant 0.000000e+00 : f32
    %27 = vector.broadcast %cst_25 : f32 to vector<64x128xf32>
    %28 = arith.maximumf %26, %27 : vector<64x128xf32>
    %29 = arith.truncf %28 : vector<64x128xf32> to vector<64x128xbf16>
    %c0_26 = arith.constant 0 : index
    %c0_27 = arith.constant 0 : index
    %30 = vector.load %arg14[%c0_26, %c0_27] : memref<64x256xbf16, #tpu.memory_space<vmem>>, vector<64x128xbf16>
    tpu.vector_store %arg14[%c0_26, %c0_27], %29 {strides = array<i32>} : memref<64x256xbf16, #tpu.memory_space<vmem>>, vector<64x128xbf16>,
    %c0_28 = arith.constant 0 : index
    %c0_29 = arith.constant 0 : index
    %31 = vector.load %arg8[%c0_28, %c0_29] : memref<256x256xbf16, #tpu.memory_space<vmem>>, vector<256x256xbf16>
    %c0_30 = arith.constant 0 : index
    %c0_31 = arith.constant 0 : index
    %32 = vector.load %arg9[%c0_30, %c0_31] : memref<1x256xf32, #tpu.memory_space<vmem>>, vector<1x256xf32>
    %c0_32 = arith.constant 0 : index
    %c0_33 = arith.constant 0 : index
    %33 = vector.load %arg14[%c0_32, %c0_33] : memref<64x256xbf16, #tpu.memory_space<vmem>>, vector<64x256xbf16>
    %cst_34 = arith.constant dense<0.000000e+00> : vector<64x256xf32>
    %34 = tpu.matmul %33, %31, %cst_34 {dimension_numbers = #tpu.dot_dimension_numbers<[1], [0], [0], [1], [0, 0, 1, 1], [], []>} : vector<64x256xbf16>, vector<256x256xbf16>, vector<64x256xf32> -> vector<64x256xf32>
    %35 = vector.broadcast %32 : vector<1x256xf32> to vector<64x256xf32>
    %36 = arith.addf %34, %35 : vector<64x256xf32>
    %37 = vector.extract_strided_slice %36 {offsets = [0, 0], sizes = [64, 128], strides = [1, 1]} : vector<64x256xf32> to vector<64x128xf32>
    %38 = vector.extract_strided_slice %36 {offsets = [0, 128], sizes = [64, 128], strides = [1, 1]} : vector<64x256xf32> to vector<64x128xf32>
    %39 = arith.truncf %38 : vector<64x128xf32> to vector<64x128xbf16>
    %cst_35 = arith.constant dense<0.000000e+00> : vector<64x128xf32>
    %40 = tpu.matmul %15, %39, %cst_35 {dimension_numbers = #tpu.dot_dimension_numbers<[1], [0], [0], [1], [0, 0, 1, 1], [], []>} : vector<64x64xbf16>, vector<64x128xbf16>, vector<64x128xf32> -> vector<64x128xf32>
    %41 = arith.addf %37, %40 : vector<64x128xf32>
    %cst_36 = arith.constant 0.000000e+00 : f32
    %42 = vector.broadcast %cst_36 : f32 to vector<64x128xf32>
    %43 = arith.maximumf %41, %42 : vector<64x128xf32>
    %44 = arith.truncf %43 : vector<64x128xf32> to vector<64x128xbf16>
    %c0_37 = arith.constant 0 : index
    %c0_38 = arith.constant 0 : index
    %45 = vector.load %arg14[%c0_37, %c0_38] : memref<64x256xbf16, #tpu.memory_space<vmem>>, vector<64x128xbf16>
    tpu.vector_store %arg14[%c0_37, %c0_38], %44 {strides = array<i32>} : memref<64x256xbf16, #tpu.memory_space<vmem>>, vector<64x128xbf16>,
    %c0_39 = arith.constant 0 : index
    %c0_40 = arith.constant 0 : index
    %46 = vector.load %arg14[%c0_39, %c0_40] : memref<64x256xbf16, #tpu.memory_space<vmem>>, vector<64x256xbf16>
    %c0_41 = arith.constant 0 : index
    %c0_42 = arith.constant 0 : index
    %47 = vector.load %arg10[%c0_41, %c0_42] : memref<256x128xbf16, #tpu.memory_space<vmem>>, vector<256x128xbf16>
    %cst_43 = arith.constant dense<0.000000e+00> : vector<64x128xf32>
    %48 = tpu.matmul %46, %47, %cst_43 {dimension_numbers = #tpu.dot_dimension_numbers<[1], [0], [0], [1], [0, 0, 1, 1], [], []>} : vector<64x256xbf16>, vector<256x128xbf16>, vector<64x128xf32> -> vector<64x128xf32>
    %c0_44 = arith.constant 0 : index
    %c0_45 = arith.constant 0 : index
    %49 = vector.load %arg11[%c0_44, %c0_45] : memref<1x128xf32, #tpu.memory_space<vmem>>, vector<1x128xf32>
    %50 = vector.broadcast %49 : vector<1x128xf32> to vector<64x128xf32>
    %51 = arith.addf %48, %50 : vector<64x128xf32>
    %c0_46 = arith.constant 0 : index
    %c0_47 = arith.constant 0 : index
    %c0_48 = arith.constant 0 : index
    %52 = vector.load %arg12[%c0_46, %c0_47, %c0_48] : memref<1x64x128xf32, #tpu.memory_space<vmem>>, vector<1x64x128xf32>
    %53 = vector.shape_cast %52 : vector<1x64x128xf32> to vector<64x128xf32>
    %54 = vector.shape_cast %51 : vector<64x128xf32> to vector<1x64x128xf32>
    tpu.vector_store %arg12[%c0_46, %c0_47, %c0_48], %54 {strides = array<i32>} : memref<1x64x128xf32, #tpu.memory_space<vmem>>, vector<1x64x128xf32>,
    %c0_49 = arith.constant 0 : index
    %c0_50 = arith.constant 0 : index
    %c0_51 = arith.constant 0 : index
    %55 = vector.load %arg13[%c0_49, %c0_50, %c0_51] : memref<1x64x128xf32, #tpu.memory_space<vmem>>, vector<1x64x128xf32>
    %56 = vector.shape_cast %55 : vector<1x64x128xf32> to vector<64x128xf32>
    %57 = vector.shape_cast %43 : vector<64x128xf32> to vector<1x64x128xf32>
    tpu.vector_store %arg13[%c0_49, %c0_50, %c0_51], %57 {strides = array<i32>} : memref<1x64x128xf32, #tpu.memory_space<vmem>>, vector<1x64x128xf32>,
    return
  }
  func.func @transform_0(%arg0: i32) -> (i32, i32, i32) {
    %c0_i32 = arith.constant 0 : i32
    %c0_i32_0 = arith.constant 0 : i32
    %c0_i32_1 = arith.constant 0 : i32
    return %arg0, %c0_i32, %c0_i32_0 : i32, i32, i32
  }
  func.func @transform_1(%arg0: i32) -> (i32, i32, i32) {
    %c0_i32 = arith.constant 0 : i32
    %c0_i32_0 = arith.constant 0 : i32
    %c0_i32_1 = arith.constant 0 : i32
    return %arg0, %c0_i32, %c0_i32_0 : i32, i32, i32
  }
  func.func @transform_2(%arg0: i32) -> (i32, i32, i32) {
    %c0_i32 = arith.constant 0 : i32
    %c0_i32_0 = arith.constant 0 : i32
    %c0_i32_1 = arith.constant 0 : i32
    return %arg0, %c0_i32, %c0_i32_0 : i32, i32, i32
  }
  func.func @transform_3(%arg0: i32) -> (i32, i32) {
    %c0_i32 = arith.constant 0 : i32
    %c0_i32_0 = arith.constant 0 : i32
    %c0_i32_1 = arith.constant 0 : i32
    return %c0_i32, %c0_i32_0 : i32, i32
  }
  func.func @transform_4(%arg0: i32) -> (i32, i32) {
    %c0_i32 = arith.constant 0 : i32
    %c0_i32_0 = arith.constant 0 : i32
    %c0_i32_1 = arith.constant 0 : i32
    return %c0_i32, %c0_i32_0 : i32, i32
  }
  func.func @transform_5(%arg0: i32) -> (i32, i32) {
    %c0_i32 = arith.constant 0 : i32
    %c0_i32_0 = arith.constant 0 : i32
    %c0_i32_1 = arith.constant 0 : i32
    return %c0_i32, %c0_i32_0 : i32, i32
  }
  func.func @transform_6(%arg0: i32) -> (i32, i32) {
    %c0_i32 = arith.constant 0 : i32
    %c0_i32_0 = arith.constant 0 : i32
    %c0_i32_1 = arith.constant 0 : i32
    return %c0_i32, %c0_i32_0 : i32, i32
  }
  func.func @transform_7(%arg0: i32) -> (i32, i32) {
    %c0_i32 = arith.constant 0 : i32
    %c0_i32_0 = arith.constant 0 : i32
    %c0_i32_1 = arith.constant 0 : i32
    return %c0_i32, %c0_i32_0 : i32, i32
  }
  func.func @transform_8(%arg0: i32) -> (i32, i32) {
    %c0_i32 = arith.constant 0 : i32
    %c0_i32_0 = arith.constant 0 : i32
    %c0_i32_1 = arith.constant 0 : i32
    return %c0_i32, %c0_i32_0 : i32, i32
  }
  func.func @transform_9(%arg0: i32) -> (i32, i32) {
    %c0_i32 = arith.constant 0 : i32
    %c0_i32_0 = arith.constant 0 : i32
    %c0_i32_1 = arith.constant 0 : i32
    return %c0_i32, %c0_i32_0 : i32, i32
  }
  func.func @transform_10(%arg0: i32) -> (i32, i32) {
    %c0_i32 = arith.constant 0 : i32
    %c0_i32_0 = arith.constant 0 : i32
    %c0_i32_1 = arith.constant 0 : i32
    return %c0_i32, %c0_i32_0 : i32, i32
  }
  func.func @transform_11(%arg0: i32) -> (i32, i32, i32) {
    %c0_i32 = arith.constant 0 : i32
    %c0_i32_0 = arith.constant 0 : i32
    %c0_i32_1 = arith.constant 0 : i32
    return %arg0, %c0_i32, %c0_i32_0 : i32, i32, i32
  }
  func.func @transform_12(%arg0: i32) -> (i32, i32, i32) {
    %c0_i32 = arith.constant 0 : i32
    %c0_i32_0 = arith.constant 0 : i32
    %c0_i32_1 = arith.constant 0 : i32
    return %arg0, %c0_i32, %c0_i32_0 : i32, i32, i32
  }
}

</mosaic_0001>

<llo_original>
// kernel: mesh_sem_refinement_stage_forward.1
$region0: #{mesh_sem_refinement_stage_forward.1}
  #allocation0 [shape = 'u32[]', space=smem, size = 0x4, offset = 0x4, fixed_abs, tag = 'smem constant byte address 0x4 - core index']
  #allocation1 [shape = 'u32[144,128]{1,0:T(1,128)}', space=vmem, size = 0x12000, scoped, tag = 'internal scratch']
  #allocation2 [shape = 'bf16[64,256]{1,0:T(16,128)(2,1)}', space=vmem, size = 0x8000, scoped, tag = 'scratch operand']
  %s0 = inlined_call_operand.vmem [shape: bf16[2,64,128], index: 0, kind: input, shape index: {}]
  %s1 = inlined_call_operand.vmem [shape: bf16[2,64,256], index: 1, kind: input, shape index: {}]
  %s2 = inlined_call_operand.vmem [shape: bf16[2,64,64], index: 2, kind: input, shape index: {}]
  %s3 = inlined_call_operand.vmem [shape: bf16[128,128], index: 3, kind: input, shape index: {}]
  %s4 = inlined_call_operand.vmem [shape: f32[1,128], index: 4, kind: input, shape index: {}]
  %s5 = inlined_call_operand.vmem [shape: bf16[256,256], index: 5, kind: input, shape index: {}]
  %s6 = inlined_call_operand.vmem [shape: f32[1,256], index: 6, kind: input, shape index: {}]
  %s7 = inlined_call_operand.vmem [shape: bf16[256,256], index: 7, kind: input, shape index: {}]
  %s8 = inlined_call_operand.vmem [shape: f32[1,256], index: 8, kind: input, shape index: {}]
  %s9 = inlined_call_operand.vmem [shape: bf16[256,128], index: 9, kind: input, shape index: {}]
  %s10 = inlined_call_operand.vmem [shape: f32[1,128], index: 10, kind: input, shape index: {}]
  %s11 = inlined_call_operand.vmem [shape: f32[2,64,128], index: 11, kind: output, shape index: {0}]
  %s12 = inlined_call_operand.vmem [shape: f32[2,64,128], index: 12, kind: output, shape index: {1}]
  %13 = xla_tuple %s11, %s12
  %s14 = sld [smem:[#allocation0]]
  $region85: #{mesh_sem_refinement_stage_forward.1} parent=0
    _
  %s16 = ssub.s32 1, %s14
  %s17 = scalar_select 0, %s16, %s14
  loop: start=0, step=1, limit=4
  $region2: #{mesh_sem_refinement_stage_forward.1} parent=0 // loop_pre_header
    _
  $region3: #{mesh_sem_refinement_stage_forward.1} parent=0 // loop_header
    %s19 = sphi 0, %s23
    %p20 = scmp.ge.s32.totalorder %s19, 4
    %s29 = sphi 0, %s31
    %s32 = sphi 0, %s29
    %s33 = sphi 0, %s32
    %s49 = sphi 0, %s33
    %s55 = sphi 0, %s57
    %s58 = sphi 0, %s55
    %s59 = sphi 0, %s58
    %s75 = sphi 0, %s59
    %s81 = sphi 0, %s83
    %s84 = sphi 0, %s81
    %s85 = sphi 0, %s84
    %s101 = sphi 0, %s85
    %s105 = sphi 0, %s105
    %s107 = sphi 0, %s105
    %s108 = sphi 0, %s107
    %s122 = sphi 0, %s108
    %s126 = sphi 0, %s126
    %s128 = sphi 0, %s126
    %s129 = sphi 0, %s128
    %s143 = sphi 0, %s129
    %s147 = sphi 0, %s147
    %s149 = sphi 0, %s147
    %s150 = sphi 0, %s149
    %s164 = sphi 0, %s150
    %s168 = sphi 0, %s168
    %s170 = sphi 0, %s168
    %s171 = sphi 0, %s170
    %s185 = sphi 0, %s171
    %s189 = sphi 0, %s189
    %s191 = sphi 0, %s189
    %s192 = sphi 0, %s191
    %s206 = sphi 0, %s192
    %s210 = sphi 0, %s210
    %s212 = sphi 0, %s210
    %s213 = sphi 0, %s212
    %s227 = sphi 0, %s213
    %s231 = sphi 0, %s231
    %s233 = sphi 0, %s231
    %s234 = sphi 0, %s233
    %s248 = sphi 0, %s234
    %s252 = sphi 0, %s252
    %s254 = sphi 0, %s252
    %s255 = sphi 0, %s254
    %s269 = sphi 0, %s255
    %s275 = sphi 0, %s277
    %s278 = sphi 0, %s275
    %s279 = sphi 0, %s278
    %s295 = sphi 0, %s279
    %s301 = sphi 0, %s303
    %s304 = sphi 0, %s301
    %s305 = sphi 0, %s304
    %s321 = sphi 0, %s305
  $region4: #{mesh_sem_refinement_stage_forward.1} parent=0 // loop_header_branch
    %22 = sbr.rel (%p20) target = $region8
  $region5: #{mesh_sem_refinement_stage_forward.1} parent=0 // loop_body
    %s24 = ssub.s32 %s19, 1
    %s25 = ssub.s32 %s19, 2
    %s26 = sadd.s32 %s19, 1
    %s27 = ssub.s32 %s19, %s26
    %p28 = scmp.eq.s32.totalorder %s27, 0
    %s30 = sadd.s32 %s29, 1
    %s31 = scalar_select %p28, %s29, %s30
    %p34 = pneg %p28
    %p35 = scmp.eq.s32.totalorder %s19, 1
    %p36 = por %p34, %p35
    %p37 = scmp.ne.s32.totalorder %s29, %s32
    %p38 = scmp.eq.s32.totalorder %s19, 0
    %p39 = por %p37, %p38
    %p40 = scmp.ne.s32.totalorder %s29, %s32
    %p41 = scmp.eq.s32.totalorder %s24, 1
    %p42 = por %p40, %p41
    %p43 = scmp.ne.s32.totalorder %s32, %s33
    %p44 = scmp.eq.s32.totalorder %s24, 0
    %p45 = por %p43, %p44
    %p46 = scmp.ne.s32.totalorder %s32, %s33
    %p47 = scmp.eq.s32.totalorder %s25, 1
    %p48 = por %p46, %p47
    %p50 = scmp.ne.s32.totalorder %s33, %s49
    %p51 = scmp.eq.s32.totalorder %s25, 0
    %p52 = por %p50, %p51
    %s53 = ssub.s32 %s19, %s26
    %p54 = scmp.eq.s32.totalorder %s53, 0
    %s56 = sadd.s32 %s55, 1
    %s57 = scalar_select %p54, %s55, %s56
    %p60 = pneg %p54
    %p61 = scmp.eq.s32.totalorder %s19, 1
    %p62 = por %p60, %p61
    %p63 = scmp.ne.s32.totalorder %s55, %s58
    %p64 = scmp.eq.s32.totalorder %s19, 0
    %p65 = por %p63, %p64
    %p66 = scmp.ne.s32.totalorder %s55, %s58
    %p67 = scmp.eq.s32.totalorder %s24, 1
    %p68 = por %p66, %p67
    %p69 = scmp.ne.s32.totalorder %s58, %s59
    %p70 = scmp.eq.s32.totalorder %s24, 0
    %p71 = por %p69, %p70
    %p72 = scmp.ne.s32.totalorder %s58, %s59
    %p73 = scmp.eq.s32.totalorder %s25, 1
    %p74 = por %p72, %p73
    %p76 = scmp.ne.s32.totalorder %s59, %s75
    %p77 = scmp.eq.s32.totalorder %s25, 0
    %p78 = por %p76, %p77
    %s79 = ssub.s32 %s19, %s26
    %p80 = scmp.eq.s32.totalorder %s79, 0
    %s82 = sadd.s32 %s81, 1
    %s83 = scalar_select %p80, %s81, %s82
    %p86 = pneg %p80
    %p87 = scmp.eq.s32.totalorder %s19, 1
    %p88 = por %p86, %p87
    %p89 = scmp.ne.s32.totalorder %s81, %s84
    %p90 = scmp.eq.s32.totalorder %s19, 0
    %p91 = por %p89, %p90
    %p92 = scmp.ne.s32.totalorder %s81, %s84
    %p93 = scmp.eq.s32.totalorder %s24, 1
    %p94 = por %p92, %p93
    %p95 = scmp.ne.s32.totalorder %s84, %s85
    %p96 = scmp.eq.s32.totalorder %s24, 0
    %p97 = por %p95, %p96
    %p98 = scmp.ne.s32.totalorder %s84, %s85
    %p99 = scmp.eq.s32.totalorder %s25, 1
    %p100 = por %p98, %p99
    %p102 = scmp.ne.s32.totalorder %s85, %s101
    %p103 = scmp.eq.s32.totalorder %s25, 0
    %p104 = por %p102, %p103
    %s106 = sadd.s32 %s105, 1
    %p109 = scmp.eq.s32.totalorder %s19, 1
    %p110 = scmp.ne.s32.totalorder %s105, %s107
    %p111 = scmp.eq.s32.totalorder %s19, 0
    %p112 = por %p110, %p111
    %p113 = scmp.ne.s32.totalorder %s105, %s107
    %p114 = scmp.eq.s32.totalorder %s24, 1
    %p115 = por %p113, %p114
    %p116 = scmp.ne.s32.totalorder %s107, %s108
    %p117 = scmp.eq.s32.totalorder %s24, 0
    %p118 = por %p116, %p117
    %p119 = scmp.ne.s32.totalorder %s107, %s108
    %p120 = scmp.eq.s32.totalorder %s25, 1
    %p121 = por %p119, %p120
    %p123 = scmp.ne.s32.totalorder %s108, %s122
    %p124 = scmp.eq.s32.totalorder %s25, 0
    %p125 = por %p123, %p124
    %s127 = sadd.s32 %s126, 1
    %p130 = scmp.eq.s32.totalorder %s19, 1
    %p131 = scmp.ne.s32.totalorder %s126, %s128
    %p132 = scmp.eq.s32.totalorder %s19, 0
    %p133 = por %p131, %p132
    %p134 = scmp.ne.s32.totalorder %s126, %s128
    %p135 = scmp.eq.s32.totalorder %s24, 1
    %p136 = por %p134, %p135
    %p137 = scmp.ne.s32.totalorder %s128, %s129
    %p138 = scmp.eq.s32.totalorder %s24, 0
    %p139 = por %p137, %p138
    %p140 = scmp.ne.s32.totalorder %s128, %s129
    %p141 = scmp.eq.s32.totalorder %s25, 1
    %p142 = por %p140, %p141
    %p144 = scmp.ne.s32.totalorder %s129, %s143
    %p145 = scmp.eq.s32.totalorder %s25, 0
    %p146 = por %p144, %p145
    %s148 = sadd.s32 %s147, 1
    %p151 = scmp.eq.s32.totalorder %s19, 1
    %p152 = scmp.ne.s32.totalorder %s147, %s149
    %p153 = scmp.eq.s32.totalorder %s19, 0
    %p154 = por %p152, %p153
    %p155 = scmp.ne.s32.totalorder %s147, %s149
    %p156 = scmp.eq.s32.totalorder %s24, 1
    %p157 = por %p155, %p156
    %p158 = scmp.ne.s32.totalorder %s149, %s150
    %p159 = scmp.eq.s32.totalorder %s24, 0
    %p160 = por %p158, %p159
    %p161 = scmp.ne.s32.totalorder %s149, %s150
    %p162 = scmp.eq.s32.totalorder %s25, 1
    %p163 = por %p161, %p162
    %p165 = scmp.ne.s32.totalorder %s150, %s164
    %p166 = scmp.eq.s32.totalorder %s25, 0
    %p167 = por %p165, %p166
    %s169 = sadd.s32 %s168, 1
    %p172 = scmp.eq.s32.totalorder %s19, 1
    %p173 = scmp.ne.s32.totalorder %s168, %s170
    %p174 = scmp.eq.s32.totalorder %s19, 0
    %p175 = por %p173, %p174
    %p176 = scmp.ne.s32.totalorder %s168, %s170
    %p177 = scmp.eq.s32.totalorder %s24, 1
    %p178 = por %p176, %p177
    %p179 = scmp.ne.s32.totalorder %s170, %s171
    %p180 = scmp.eq.s32.totalorder %s24, 0
    %p181 = por %p179, %p180
    %p182 = scmp.ne.s32.totalorder %s170, %s171
    %p183 = scmp.eq.s32.totalorder %s25, 1
    %p184 = por %p182, %p183
    %p186 = scmp.ne.s32.totalorder %s171, %s185
    %p187 = scmp.eq.s32.totalorder %s25, 0
    %p188 = por %p186, %p187
    %s190 = sadd.s32 %s189, 1
    %p193 = scmp.eq.s32.totalorder %s19, 1
    %p194 = scmp.ne.s32.totalorder %s189, %s191
    %p195 = scmp.eq.s32.totalorder %s19, 0
    %p196 = por %p194, %p195
    %p197 = scmp.ne.s32.totalorder %s189, %s191
    %p198 = scmp.eq.s32.totalorder %s24, 1
    %p199 = por %p197, %p198
    %p200 = scmp.ne.s32.totalorder %s191, %s192
    %p201 = scmp.eq.s32.totalorder %s24, 0
    %p202 = por %p200, %p201
    %p203 = scmp.ne.s32.totalorder %s191, %s192
    %p204 = scmp.eq.s32.totalorder %s25, 1
    %p205 = por %p203, %p204
    %p207 = scmp.ne.s32.totalorder %s192, %s206
    %p208 = scmp.eq.s32.totalorder %s25, 0
    %p209 = por %p207, %p208
    %s211 = sadd.s32 %s210, 1
    %p214 = scmp.eq.s32.totalorder %s19, 1
    %p215 = scmp.ne.s32.totalorder %s210, %s212
    %p216 = scmp.eq.s32.totalorder %s19, 0
    %p217 = por %p215, %p216
    %p218 = scmp.ne.s32.totalorder %s210, %s212
    %p219 = scmp.eq.s32.totalorder %s24, 1
    %p220 = por %p218, %p219
    %p221 = scmp.ne.s32.totalorder %s212, %s213
    %p222 = scmp.eq.s32.totalorder %s24, 0
    %p223 = por %p221, %p222
    %p224 = scmp.ne.s32.totalorder %s212, %s213
    %p225 = scmp.eq.s32.totalorder %s25, 1
    %p226 = por %p224, %p225
    %p228 = scmp.ne.s32.totalorder %s213, %s227
    %p229 = scmp.eq.s32.totalorder %s25, 0
    %p230 = por %p228, %p229
    %s232 = sadd.s32 %s231, 1
    %p235 = scmp.eq.s32.totalorder %s19, 1
    %p236 = scmp.ne.s32.totalorder %s231, %s233
    %p237 = scmp.eq.s32.totalorder %s19, 0
    %p238 = por %p236, %p237
    %p239 = scmp.ne.s32.totalorder %s231, %s233
    %p240 = scmp.eq.s32.totalorder %s24, 1
    %p241 = por %p239, %p240
    %p242 = scmp.ne.s32.totalorder %s233, %s234
    %p243 = scmp.eq.s32.totalorder %s24, 0
    %p244 = por %p242, %p243
    %p245 = scmp.ne.s32.totalorder %s233, %s234
    %p246 = scmp.eq.s32.totalorder %s25, 1
    %p247 = por %p245, %p246
    %p249 = scmp.ne.s32.totalorder %s234, %s248
    %p250 = scmp.eq.s32.totalorder %s25, 0
    %p251 = por %p249, %p250
    %s253 = sadd.s32 %s252, 1
    %p256 = scmp.eq.s32.totalorder %s19, 1
    %p257 = scmp.ne.s32.totalorder %s252, %s254
    %p258 = scmp.eq.s32.totalorder %s19, 0
    %p259 = por %p257, %p258
    %p260 = scmp.ne.s32.totalorder %s252, %s254
    %p261 = scmp.eq.s32.totalorder %s24, 1
    %p262 = por %p260, %p261
    %p263 = scmp.ne.s32.totalorder %s254, %s255
    %p264 = scmp.eq.s32.totalorder %s24, 0
    %p265 = por %p263, %p264
    %p266 = scmp.ne.s32.totalorder %s254, %s255
    %p267 = scmp.eq.s32.totalorder %s25, 1
    %p268 = por %p266, %p267
    %p270 = scmp.ne.s32.totalorder %s255, %s269
    %p271 = scmp.eq.s32.totalorder %s25, 0
    %p272 = por %p270, %p271
    %s273 = ssub.s32 %s19, %s26
    %p274 = scmp.eq.s32.totalorder %s273, 0
    %s276 = sadd.s32 %s275, 1
    %s277 = scalar_select %p274, %s275, %s276
    %p280 = pneg %p274
    %p281 = scmp.eq.s32.totalorder %s19, 1
    %p282 = por %p280, %p281
    %p283 = scmp.ne.s32.totalorder %s275, %s278
    %p284 = scmp.eq.s32.totalorder %s19, 0
    %p285 = por %p283, %p284
    %p286 = scmp.ne.s32.totalorder %s275, %s278
    %p287 = scmp.eq.s32.totalorder %s24, 1
    %p288 = por %p286, %p287
    %p289 = scmp.ne.s32.totalorder %s278, %s279
    %p290 = scmp.eq.s32.totalorder %s24, 0
    %p291 = por %p289, %p290
    %p292 = scmp.ne.s32.totalorder %s278, %s279
    %p293 = scmp.eq.s32.totalorder %s25, 1
    %p294 = por %p292, %p293
    %p296 = scmp.ne.s32.totalorder %s279, %s295
    %p297 = scmp.eq.s32.totalorder %s25, 0
    %p298 = por %p296, %p297
    %s299 = ssub.s32 %s19, %s26
    %p300 = scmp.eq.s32.totalorder %s299, 0
    %s302 = sadd.s32 %s301, 1
    %s303 = scalar_select %p300, %s301, %s302
    %p306 = pneg %p300
    %p307 = scmp.eq.s32.totalorder %s19, 1
    %p308 = por %p306, %p307
    %p309 = scmp.ne.s32.totalorder %s301, %s304
    %p310 = scmp.eq.s32.totalorder %s19, 0
    %p311 = por %p309, %p310
    %p312 = scmp.ne.s32.totalorder %s301, %s304
    %p313 = scmp.eq.s32.totalorder %s24, 1
    %p314 = por %p312, %p313
    %p315 = scmp.ne.s32.totalorder %s304, %s305
    %p316 = scmp.eq.s32.totalorder %s24, 0
    %p317 = por %p315, %p316
    %p318 = scmp.ne.s32.totalorder %s304, %s305
    %p319 = scmp.eq.s32.totalorder %s25, 1
    %p320 = por %p318, %p319
    %p322 = scmp.ne.s32.totalorder %s305, %s321
    %p323 = scmp.eq.s32.totalorder %s25, 0
    %p324 = por %p322, %p323
    %p325 = scmp.le.s32.totalorder 1, %s19
    %p326 = scmp.lt.s32.totalorder %s19, 3
    %p327 = pnand %p325, %p326
    %p328 = pneg %p327
    // Predicated region
    $region9: #{mesh_sem_refinement_stage_forward.1} parent=5 // pred_check
      _
    $region10: #{mesh_sem_refinement_stage_forward.1} parent=5 // pred_check_branch
      %330 = sbr.rel (%p327) target = $region12
    $region11: #{mesh_sem_refinement_stage_forward.1} parent=5 // pred_region
      %s331 = ssub.s32 %s19, 1
      // Predicated region
      $region13: #{mesh_sem_refinement_stage_forward.1} parent=11 // pred_check
        %p332 = pneg %p118
      $region14: #{mesh_sem_refinement_stage_forward.1} parent=11 // pred_check_branch
        %334 = sbr.rel (%p332) target = $region16
      $region15: #{mesh_sem_refinement_stage_forward.1} parent=11 // pred_region
        _
      $region16: #{mesh_sem_refinement_stage_forward.1} parent=11 // pred_fallthru
        _
      // Predicated region
      $region17: #{mesh_sem_refinement_stage_forward.1} parent=11 // pred_check
        %p335 = pneg %p139
      $region18: #{mesh_sem_refinement_stage_forward.1} parent=11 // pred_check_branch
        %337 = sbr.rel (%p335) target = $region20
      $region19: #{mesh_sem_refinement_stage_forward.1} parent=11 // pred_region
        _
      $region20: #{mesh_sem_refinement_stage_forward.1} parent=11 // pred_fallthru
        _
      // Predicated region
      $region21: #{mesh_sem_refinement_stage_forward.1} parent=11 // pred_check
        %p338 = pneg %p160
      $region22: #{mesh_sem_refinement_stage_forward.1} parent=11 // pred_check_branch
        %340 = sbr.rel (%p338) target = $region24
      $region23: #{mesh_sem_refinement_stage_forward.1} parent=11 // pred_region
        _
      $region24: #{mesh_sem_refinement_stage_forward.1} parent=11 // pred_fallthru
        _
      // Predicated region
      $region25: #{mesh_sem_refinement_stage_forward.1} parent=11 // pred_check
        %p341 = pneg %p181
      $region26: #{mesh_sem_refinement_stage_forward.1} parent=11 // pred_check_branch
        %343 = sbr.rel (%p341) target = $region28
      $region27: #{mesh_sem_refinement_stage_forward.1} parent=11 // pred_region
        _
      $region28: #{mesh_sem_refinement_stage_forward.1} parent=11 // pred_fallthru
        _
      // Predicated region
      $region29: #{mesh_sem_refinement_stage_forward.1} parent=11 // pred_check
        %p344 = pneg %p202
      $region30: #{mesh_sem_refinement_stage_forward.1} parent=11 // pred_check_branch
        %346 = sbr.rel (%p344) target = $region32
      $region31: #{mesh_sem_refinement_stage_forward.1} parent=11 // pred_region
        _
      $region32: #{mesh_sem_refinement_stage_forward.1} parent=11 // pred_fallthru
        _
      // Predicated region
      $region33: #{mesh_sem_refinement_stage_forward.1} parent=11 // pred_check
        %p347 = pneg %p223
      $region34: #{mesh_sem_refinement_stage_forward.1} parent=11 // pred_check_branch
        %349 = sbr.rel (%p347) target = $region36
      $region35: #{mesh_sem_refinement_stage_forward.1} parent=11 // pred_region
        _
      $region36: #{mesh_sem_refinement_stage_forward.1} parent=11 // pred_fallthru
        _
      // Predicated region
      $region37: #{mesh_sem_refinement_stage_forward.1} parent=11 // pred_check
        %p350 = pneg %p244
      $region38: #{mesh_sem_refinement_stage_forward.1} parent=11 // pred_check_branch
        %352 = sbr.rel (%p350) target = $region40
      $region39: #{mesh_sem_refinement_stage_forward.1} parent=11 // pred_region
        _
      $region40: #{mesh_sem_refinement_stage_forward.1} parent=11 // pred_fallthru
        _
      // Predicated region
      $region41: #{mesh_sem_refinement_stage_forward.1} parent=11 // pred_check
        %p353 = pneg %p265
      $region42: #{mesh_sem_refinement_stage_forward.1} parent=11 // pred_check_branch
        %355 = sbr.rel (%p353) target = $region44
      $region43: #{mesh_sem_refinement_stage_forward.1} parent=11 // pred_region
        _
      $region44: #{mesh_sem_refinement_stage_forward.1} parent=11 // pred_fallthru
        _
    $region12: #{mesh_sem_refinement_stage_forward.1} parent=5 // pred_fallthru
      _
    %p356 = scmp.lt.s32.totalorder %s19, 2
    // Predicated region
    $region45: #{mesh_sem_refinement_stage_forward.1} parent=5 // pred_check
      %p357 = pneg %p356
    $region46: #{mesh_sem_refinement_stage_forward.1} parent=5 // pred_check_branch
      %359 = sbr.rel (%p357) target = $region48
    $region47: #{mesh_sem_refinement_stage_forward.1} parent=5 // pred_region
      // Predicated region
      $region49: #{mesh_sem_refinement_stage_forward.1} parent=47 // pred_check
        %p360 = pneg %p39
      $region50: #{mesh_sem_refinement_stage_forward.1} parent=47 // pred_check_branch
        %362 = sbr.rel (%p360) target = $region52
      $region51: #{mesh_sem_refinement_stage_forward.1} parent=47 // pred_region
        %p363 = scmp.lt.s32.totalorder %s19, 1
        %s364 = scalar_select %p363, %s19, 1
        %s365 = smul.addr %s364, 8
        %s366 = smul.addr %s365, 4
        %s367 = scalar_lea.vmem %s0, %s366
      $region52: #{mesh_sem_refinement_stage_forward.1} parent=47 // pred_fallthru
        _
      // Predicated region
      $region53: #{mesh_sem_refinement_stage_forward.1} parent=47 // pred_check
        %p368 = pneg %p65
      $region54: #{mesh_sem_refinement_stage_forward.1} parent=47 // pred_check_branch
        %370 = sbr.rel (%p368) target = $region56
      $region55: #{mesh_sem_refinement_stage_forward.1} parent=47 // pred_region
        %p371 = scmp.lt.s32.totalorder %s19, 1
        %s372 = scalar_select %p371, %s19, 1
        %s373 = smul.addr %s372, 16
        %s374 = smul.addr %s373, 4
        %s375 = scalar_lea.vmem %s1, %s374
      $region56: #{mesh_sem_refinement_stage_forward.1} parent=47 // pred_fallthru
        _
      // Predicated region
      $region57: #{mesh_sem_refinement_stage_forward.1} parent=47 // pred_check
        %p376 = pneg %p91
      $region58: #{mesh_sem_refinement_stage_forward.1} parent=47 // pred_check_branch
        %378 = sbr.rel (%p376) target = $region60
      $region59: #{mesh_sem_refinement_stage_forward.1} parent=47 // pred_region
        %p379 = scmp.lt.s32.totalorder %s19, 1
        %s380 = scalar_select %p379, %s19, 1
        %s381 = smul.addr %s380, 8
        %s382 = smul.addr %s381, 4
        %s383 = scalar_lea.vmem %s2, %s382
      $region60: #{mesh_sem_refinement_stage_forward.1} parent=47 // pred_fallthru
        _
    $region48: #{mesh_sem_refinement_stage_forward.1} parent=5 // pred_fallthru
      _
    %p384 = scmp.le.s32.totalorder 1, %s19
    %p385 = scmp.lt.s32.totalorder %s19, 3
    %p386 = pnand %p384, %p385
    %p387 = pneg %p386
    // Predicated region
    $region61: #{mesh_sem_refinement_stage_forward.1} parent=5 // pred_check
      _
    $region62: #{mesh_sem_refinement_stage_forward.1} parent=5 // pred_check_branch
      %389 = sbr.rel (%p386) target = $region64
    $region63: #{mesh_sem_refinement_stage_forward.1} parent=5 // pred_region
      %s390 = ssub.s32 %s19, 1
      %p391 = scmp.lt.s32.totalorder %s24, 1
      %s392 = scalar_select %p391, %s24, 1
      %s393 = smul.addr %s392, 8
      %s394 = smul.addr %s393, 4
      %s395 = scalar_lea.vmem %s0, %s394
      %p396 = pneg %p45
      %p397 = pneg %p42
      %p398 = scmp.lt.s32.totalorder %s24, 1
      %s399 = scalar_select %p398, %s24, 1
      %s400 = smul.addr %s399, 16
      %s401 = smul.addr %s400, 4
      %s402 = scalar_lea.vmem %s1, %s401
      %p403 = pneg %p71
      %p404 = pneg %p68
      %p405 = scmp.lt.s32.totalorder %s24, 1
      %s406 = scalar_select %p405, %s24, 1
      %s407 = smul.addr %s406, 8
      %s408 = smul.addr %s407, 4
      %s409 = scalar_lea.vmem %s2, %s408
      %p410 = pneg %p97
      %p411 = pneg %p94
      %p412 = pneg %p118
      %p413 = pneg %p115
      %p414 = pneg %p139
      %p415 = pneg %p136
      %p416 = pneg %p160
      %p417 = pneg %p157
      %p418 = pneg %p181
      %p419 = pneg %p178
      %p420 = pneg %p202
      %p421 = pneg %p199
      %p422 = pneg %p223
      %p423 = pneg %p220
      %p424 = pneg %p244
      %p425 = pneg %p241
      %p426 = pneg %p265
      %p427 = pneg %p262
      %p428 = pneg %p291
      %p429 = pneg %p288
      %p430 = scmp.lt.s32.totalorder %s24, 1
      %s431 = scalar_select %p430, %s24, 1
      %s432 = smul.addr %s431, 8
      %s433 = smul.addr %s432, 8
      %s434 = scalar_lea.vmem %s11, %s433
      %p435 = pneg %p317
      %p436 = pneg %p314
      %p437 = scmp.lt.s32.totalorder %s24, 1
      %s438 = scalar_select %p437, %s24, 1
      %s439 = smul.addr %s438, 8
      %s440 = smul.addr %s439, 8
      %s441 = scalar_lea.vmem %s12, %s440
      %p442 = scmp.lt.s32.totalorder %s24, 1
      %s443 = scalar_select %p442, %s24, 1
      %s444 = smul.addr %s443, 8
      %s445 = smul.addr %s444, 4
      %s446 = scalar_lea.vmem %s0, %s445
      %p447 = scmp.lt.s32.totalorder %s24, 1
      %s448 = scalar_select %p447, %s24, 1
      %s449 = smul.addr %s448, 16
      %s450 = smul.addr %s449, 4
      %s451 = scalar_lea.vmem %s1, %s450
      %p452 = scmp.lt.s32.totalorder %s24, 1
      %s453 = scalar_select %p452, %s24, 1
      %s454 = smul.addr %s453, 8
      %s455 = smul.addr %s454, 4
      %s456 = scalar_lea.vmem %s2, %s455
      %p457 = scmp.lt.s32.totalorder %s24, 1
      %s458 = scalar_select %p457, %s24, 1
      %s459 = smul.addr %s458, 8
      %s460 = smul.addr %s459, 8
      %s461 = scalar_lea.vmem %s11, %s460
      %p462 = scmp.lt.s32.totalorder %s24, 1
      %s463 = scalar_select %p462, %s24, 1
      %s464 = smul.addr %s463, 8
      %s465 = smul.addr %s464, 8
      %s466 = scalar_lea.vmem %s12, %s465
      %v468 = vld [vmem:[%s451] sm:$0xff]
      %v469 = vld [vmem:[%s451 + $0x8] sm:$0xff]
      %v470 = vld [vmem:[%s451 + $0x10] sm:$0xff]
      %v471 = vld [vmem:[%s451 + $0x18] sm:$0xff]
      %v472 = vld [vmem:[%s451 + $0x20] sm:$0xff]
      %v473 = vld [vmem:[%s451 + $0x28] sm:$0xff]
      %v474 = vld [vmem:[%s451 + $0x30] sm:$0xff]
      %v475 = vld [vmem:[%s451 + $0x38] sm:$0xff]
      %v484 = vunpack.c.l.b16 %v468
      %v485 = vunpack.c.h.b16 %v468
      %v486 = vunpack.c.l.b16 %v469
      %v487 = vunpack.c.h.b16 %v469
      %v488 = vunpack.c.l.b16 %v470
      %v489 = vunpack.c.h.b16 %v470
      %v490 = vunpack.c.l.b16 %v471
      %v491 = vunpack.c.h.b16 %v471
      %v492 = vunpack.c.l.b16 %v472
      %v493 = vunpack.c.h.b16 %v472
      %v494 = vunpack.c.l.b16 %v473
      %v495 = vunpack.c.h.b16 %v473
      %v496 = vunpack.c.l.b16 %v474
      %v497 = vunpack.c.h.b16 %v474
      %v498 = vunpack.c.l.b16 %v475
      %v499 = vunpack.c.h.b16 %v475
      %v500 = vpack.c.b16 %v486, %v484
      %v501 = vpack.c.b16 %v487, %v485
      %v502 = vpack.c.b16 %v490, %v488
      %v503 = vpack.c.b16 %v491, %v489
      %v504 = vpack.c.b16 %v494, %v492
      %v505 = vpack.c.b16 %v495, %v493
      %v506 = vpack.c.b16 %v498, %v496
      %v507 = vpack.c.b16 %v499, %v497
      %516 = vst [vmem:[#allocation2] sm:$0xff] %v500
      %517 = vst [vmem:[#allocation2 + $0x8] sm:$0xff] %v501
      %518 = vst [vmem:[#allocation2 + $0x10] sm:$0xff] %v502
      %519 = vst [vmem:[#allocation2 + $0x18] sm:$0xff] %v503
      %520 = vst [vmem:[#allocation2 + $0x20] sm:$0xff] %v504
      %521 = vst [vmem:[#allocation2 + $0x28] sm:$0xff] %v505
      %522 = vst [vmem:[#allocation2 + $0x30] sm:$0xff] %v506
      %523 = vst [vmem:[#allocation2 + $0x38] sm:$0xff] %v507
      %v524 = vld [vmem:[%s446] sm:$0xf]
      %v525 = vld [vmem:[%s446 + $0x4] sm:$0xf]
      %v526 = vld [vmem:[%s446 + $0x8] sm:$0xf]
      %v527 = vld [vmem:[%s446 + $0xc] sm:$0xf]
      %v528 = vld [vmem:[%s446 + $0x10] sm:$0xf]
      %v529 = vld [vmem:[%s446 + $0x14] sm:$0xf]
      %v530 = vld [vmem:[%s446 + $0x18] sm:$0xf]
      %v531 = vld [vmem:[%s446 + $0x1c] sm:$0xf]
      %v532 = vld [vmem:[%s3] sm:$0xf]
      %v533 = vld [vmem:[%s3 + $0x4] sm:$0xf]
      %v534 = vld [vmem:[%s3 + $0x8] sm:$0xf]
      %v535 = vld [vmem:[%s3 + $0xc] sm:$0xf]
      %v536 = vld [vmem:[%s3 + $0x10] sm:$0xf]
      %v537 = vld [vmem:[%s3 + $0x14] sm:$0xf]
      %v538 = vld [vmem:[%s3 + $0x18] sm:$0xf]
      %v539 = vld [vmem:[%s3 + $0x1c] sm:$0xf]
      %v540 = vld [vmem:[%s3 + $0x20] sm:$0xf]
      %v541 = vld [vmem:[%s3 + $0x24] sm:$0xf]
      %v542 = vld [vmem:[%s3 + $0x28] sm:$0xf]
      %v543 = vld [vmem:[%s3 + $0x2c] sm:$0xf]
      %v544 = vld [vmem:[%s3 + $0x30] sm:$0xf]
      %v545 = vld [vmem:[%s3 + $0x34] sm:$0xf]
      %v546 = vld [vmem:[%s3 + $0x38] sm:$0xf]
      %v547 = vld [vmem:[%s3 + $0x3c] sm:$0xf]
      %v548 = vld [vmem:[%s4] sm:$0x1]
      %v550 = vlaneseq
      %v551 = vshrl.u32 %v550, 7
      %v552 = vsub.s32 0, %v551
      %v553 = vrot.slane %v548, %v552
      %v563 = vunpack.c.l.b16 %v524
      %v564 = vunpack.c.l.b16 %v525
      %v565 = vunpack.c.l.b16 %v526
      %v566 = vunpack.c.l.b16 %v527
      %v567 = vunpack.c.l.b16 %v528
      %v568 = vunpack.c.l.b16 %v529
      %v569 = vunpack.c.l.b16 %v530
      %v570 = vunpack.c.l.b16 %v531
      %v571 = vpack.c.b16 %v564, %v563
      %v572 = vpack.c.b16 %v566, %v565
      %v573 = vpack.c.b16 %v568, %v567
      %v574 = vpack.c.b16 %v570, %v569
      %v595 = vunpack.c.l.b16 %v532
      %v596 = vunpack.c.l.b16 %v533
      %v597 = vunpack.c.l.b16 %v534
      %v598 = vunpack.c.l.b16 %v535
      %v599 = vunpack.c.l.b16 %v536
      %v600 = vunpack.c.l.b16 %v537
      %v601 = vunpack.c.l.b16 %v538
      %v602 = vunpack.c.l.b16 %v539
      %v603 = vunpack.c.l.b16 %v540
      %v604 = vunpack.c.l.b16 %v541
      %v605 = vunpack.c.l.b16 %v542
      %v606 = vunpack.c.l.b16 %v543
      %v607 = vunpack.c.l.b16 %v544
      %v608 = vunpack.c.l.b16 %v545
      %v609 = vunpack.c.l.b16 %v546
      %v610 = vunpack.c.l.b16 %v547
      %v611 = vpack.c.b16 %v596, %v595
      %v612 = vpack.c.b16 %v598, %v597
      %v613 = vpack.c.b16 %v600, %v599
      %v614 = vpack.c.b16 %v602, %v601
      %v615 = vpack.c.b16 %v604, %v603
      %v616 = vpack.c.b16 %v606, %v605
      %v617 = vpack.c.b16 %v608, %v607
      %v618 = vpack.c.b16 %v610, %v609
      %627 = vmatprep.subr.bf16.mxu0 0
      %628 = vmatpush1.bf16.msra.mxu0 %v611
      %629 = vmatprep.subr.bf16.mxu0 0
      %630 = vmatpush1.bf16.msra.mxu0 %v612
      %631 = vmatprep.subr.bf16.mxu0 0
      %632 = vmatpush1.bf16.msra.mxu0 %v613
      %633 = vmatprep.subr.bf16.mxu0 0
      %634 = vmatpush1.bf16.msra.mxu0 %v614
      %635 = vmatprep.subr.bf16.mxu0 0
      %636 = vmatpush1.bf16.msra.mxu0 %v615
      %637 = vmatprep.subr.bf16.mxu0 0
      %638 = vmatpush1.bf16.msra.mxu0 %v616
      %639 = vmatprep.subr.bf16.mxu0 0
      %640 = vmatpush1.bf16.msra.mxu0 %v617
      %641 = vmatprep.subr.bf16.mxu0 0
      %642 = vmatpush1.bf16.msra.mxu0 %v618
      %643 = vmatprep.subr.bf16.mxu0 0
      %644 = vmatpush1.bf16.msra.mxu0 0
      %645 = vmatprep.subr.bf16.mxu0 0
      %646 = vmatpush1.bf16.msra.mxu0 0
      %647 = vmatprep.subr.bf16.mxu0 0
      %648 = vmatpush1.bf16.msra.mxu0 0
      %649 = vmatprep.subr.bf16.mxu0 0
      %650 = vmatpush1.bf16.msra.mxu0 0
      %651 = vmatprep.subr.bf16.mxu0 0
      %652 = vmatpush1.bf16.msra.mxu0 0
      %653 = vmatprep.subr.bf16.mxu0 0
      %654 = vmatpush1.bf16.msra.mxu0 0
      %655 = vmatprep.subr.bf16.mxu0 0
      %656 = vmatpush1.bf16.msra.mxu0 0
      %657 = vmatprep.subr.bf16.mxu0 0
      %658 = vmatpush1.bf16.msra.mxu0 0
      %659 = vmatprep.mubr.bf16.mxu0 0
      %660 = vmatmul.mubr.bf16.gmra.mrb[0].mxu0 %v571
      %v661 = vpop.f32.mrb[0].mxu0
      %v662 = vadd.f32 %v553, %v661
      %v663 = vpop.f32.mrb[0].mxu0
      %v664 = vpop.f32.mrb[0].mxu0
      %v665 = vadd.f32 %v553, %v664
      %v666 = vpop.f32.mrb[0].mxu0
      %667 = vmatprep.mubr.bf16.mxu0 0
      %668 = vmatmul.mubr.bf16.gmra.mrb[0].mxu0 %v572
      %v669 = vpop.f32.mrb[0].mxu0
      %v670 = vadd.f32 %v553, %v669
      %v671 = vpop.f32.mrb[0].mxu0
      %v672 = vpop.f32.mrb[0].mxu0
      %v673 = vadd.f32 %v553, %v672
      %v674 = vpop.f32.mrb[0].mxu0
      %675 = vmatprep.mubr.bf16.mxu0 0
      %676 = vmatmul.mubr.bf16.gmra.mrb[0].mxu0 %v573
      %v677 = vpop.f32.mrb[0].mxu0
      %v678 = vadd.f32 %v553, %v677
      %v679 = vpop.f32.mrb[0].mxu0
      %v680 = vpop.f32.mrb[0].mxu0
      %v681 = vadd.f32 %v553, %v680
      %v682 = vpop.f32.mrb[0].mxu0
      %683 = vmatprep.mubr.bf16.mxu0 0
      %684 = vmatmul.mubr.bf16.gmra.mrb[0].mxu0 %v574
      %v685 = vpop.f32.mrb[0].mxu0
      %v686 = vadd.f32 %v553, %v685
      %v687 = vpop.f32.mrb[0].mxu0
      %v688 = vpop.f32.mrb[0].mxu0
      %v689 = vadd.f32 %v553, %v688
      %v690 = vpop.f32.mrb[0].mxu0
      %691 = vdwg.mxu0
      %v692 = vmax.f32 %v662, 0.0
      %v693 = vmax.f32 %v665, 0.0
      %v694 = vmax.f32 %v670, 0.0
      %v695 = vmax.f32 %v673, 0.0
      %v696 = vmax.f32 %v678, 0.0
      %v697 = vmax.f32 %v681, 0.0
      %v698 = vmax.f32 %v686, 0.0
      %v699 = vmax.f32 %v689, 0.0
      %v700 = vpack.c.bf16 %v693, %v692
      %v701 = vpack.c.bf16 %v695, %v694
      %v702 = vpack.c.bf16 %v697, %v696
      %v703 = vpack.c.bf16 %v699, %v698
      %704 = vst [vmem:[#allocation2] sm:$0xff] %v700
      %705 = vst [vmem:[#allocation2 + $0x10] sm:$0xff] %v701
      %706 = vst [vmem:[#allocation2 + $0x20] sm:$0xff] %v702
      %707 = vst [vmem:[#allocation2 + $0x30] sm:$0xff] %v703
      %v708 = vld [vmem:[%s456] sm:$0xf]
      %v709 = vld [vmem:[%s456 + $0x4] sm:$0xf]
      %v710 = vld [vmem:[%s456 + $0x8] sm:$0xf]
      %v711 = vld [vmem:[%s456 + $0xc] sm:$0xf]
      %v712 = vld [vmem:[%s456 + $0x10] sm:$0xf]
      %v713 = vld [vmem:[%s456 + $0x14] sm:$0xf]
      %v714 = vld [vmem:[%s456 + $0x18] sm:$0xf]
      %v715 = vld [vmem:[%s456 + $0x1c] sm:$0xf]
      %v716 = vld [vmem:[%s5] sm:$0xff]
      %v717 = vld [vmem:[%s5 + $0x8] sm:$0xff]
      %v718 = vld [vmem:[%s5 + $0x10] sm:$0xff]
      %v719 = vld [vmem:[%s5 + $0x18] sm:$0xff]
      %v720 = vld [vmem:[%s5 + $0x20] sm:$0xff]
      %v721 = vld [vmem:[%s5 + $0x28] sm:$0xff]
      %v722 = vld [vmem:[%s5 + $0x30] sm:$0xff]
      %v723 = vld [vmem:[%s5 + $0x38] sm:$0xff]
      %v724 = vld [vmem:[%s5 + $0x40] sm:$0xff]
      %v725 = vld [vmem:[%s5 + $0x48] sm:$0xff]
      %v726 = vld [vmem:[%s5 + $0x50] sm:$0xff]
      %v727 = vld [vmem:[%s5 + $0x58] sm:$0xff]
      %v728 = vld [vmem:[%s5 + $0x60] sm:$0xff]
      %v729 = vld [vmem:[%s5 + $0x68] sm:$0xff]
      %v730 = vld [vmem:[%s5 + $0x70] sm:$0xff]
      %v731 = vld [vmem:[%s5 + $0x78] sm:$0xff]
      %v732 = vld [vmem:[%s5 + $0x80] sm:$0xff]
      %v733 = vld [vmem:[%s5 + $0x88] sm:$0xff]
      %v734 = vld [vmem:[%s5 + $0x90] sm:$0xff]
      %v735 = vld [vmem:[%s5 + $0x98] sm:$0xff]
      %v736 = vld [vmem:[%s5 + $0xa0] sm:$0xff]
      %v737 = vld [vmem:[%s5 + $0xa8] sm:$0xff]
      %v738 = vld [vmem:[%s5 + $0xb0] sm:$0xff]
      %v739 = vld [vmem:[%s5 + $0xb8] sm:$0xff]
      %v740 = vld [vmem:[%s5 + $0xc0] sm:$0xff]
      %v741 = vld [vmem:[%s5 + $0xc8] sm:$0xff]
      %v742 = vld [vmem:[%s5 + $0xd0] sm:$0xff]
      %v743 = vld [vmem:[%s5 + $0xd8] sm:$0xff]
      %v744 = vld [vmem:[%s5 + $0xe0] sm:$0xff]
      %v745 = vld [vmem:[%s5 + $0xe8] sm:$0xff]
      %v746 = vld [vmem:[%s5 + $0xf0] sm:$0xff]
      %v747 = vld [vmem:[%s5 + $0xf8] sm:$0xff]
      %v748 = vld [vmem:[%s6] sm:$0x3]
      %v749 = vld [vmem:[#allocation2] sm:$0xff]
      %v750 = vld [vmem:[#allocation2 + $0x8] sm:$0xff]
      %v751 = vld [vmem:[#allocation2 + $0x10] sm:$0xff]
      %v752 = vld [vmem:[#allocation2 + $0x18] sm:$0xff]
      %v753 = vld [vmem:[#allocation2 + $0x20] sm:$0xff]
      %v754 = vld [vmem:[#allocation2 + $0x28] sm:$0xff]
      %v755 = vld [vmem:[#allocation2 + $0x30] sm:$0xff]
      %v756 = vld [vmem:[#allocation2 + $0x38] sm:$0xff]
      %v758 = vlaneseq
      %v759 = vshrl.u32 %v758, 7
      %v760 = vsub.s32 0, %v759
      %v761 = vrot.slane %v748, %v760
      %v762 = vlaneseq
      %v763 = vshrl.u32 %v762, 7
      %v764 = vsub.s32 1, %v763
      %v765 = vrot.slane %v748, %v764
      %v800 = vunpack.c.l.b16 %v716
      %v801 = vunpack.c.h.b16 %v716
      %v802 = vunpack.c.l.b16 %v717
      %v803 = vunpack.c.h.b16 %v717
      %v804 = vunpack.c.l.b16 %v718
      %v805 = vunpack.c.h.b16 %v718
      %v806 = vunpack.c.l.b16 %v719
      %v807 = vunpack.c.h.b16 %v719
      %v808 = vunpack.c.l.b16 %v720
      %v809 = vunpack.c.h.b16 %v720
      %v810 = vunpack.c.l.b16 %v721
      %v811 = vunpack.c.h.b16 %v721
      %v812 = vunpack.c.l.b16 %v722
      %v813 = vunpack.c.h.b16 %v722
      %v814 = vunpack.c.l.b16 %v723
      %v815 = vunpack.c.h.b16 %v723
      %v816 = vunpack.c.l.b16 %v724
      %v817 = vunpack.c.h.b16 %v724
      %v818 = vunpack.c.l.b16 %v725
      %v819 = vunpack.c.h.b16 %v725
      %v820 = vunpack.c.l.b16 %v726
      %v821 = vunpack.c.h.b16 %v726
      %v822 = vunpack.c.l.b16 %v727
      %v823 = vunpack.c.h.b16 %v727
      %v824 = vunpack.c.l.b16 %v728
      %v825 = vunpack.c.h.b16 %v728
      %v826 = vunpack.c.l.b16 %v729
      %v827 = vunpack.c.h.b16 %v729
      %v828 = vunpack.c.l.b16 %v730
      %v829 = vunpack.c.h.b16 %v730
      %v830 = vunpack.c.l.b16 %v731
      %v831 = vunpack.c.h.b16 %v731
      %v832 = vunpack.c.l.b16 %v732
      %v833 = vunpack.c.h.b16 %v732
      %v834 = vunpack.c.l.b16 %v733
      %v835 = vunpack.c.h.b16 %v733
      %v836 = vunpack.c.l.b16 %v734
      %v837 = vunpack.c.h.b16 %v734
      %v838 = vunpack.c.l.b16 %v735
      %v839 = vunpack.c.h.b16 %v735
      %v840 = vunpack.c.l.b16 %v736
      %v841 = vunpack.c.h.b16 %v736
      %v842 = vunpack.c.l.b16 %v737
      %v843 = vunpack.c.h.b16 %v737
      %v844 = vunpack.c.l.b16 %v738
      %v845 = vunpack.c.h.b16 %v738
      %v846 = vunpack.c.l.b16 %v739
      %v847 = vunpack.c.h.b16 %v739
      %v848 = vunpack.c.l.b16 %v740
      %v849 = vunpack.c.h.b16 %v740
      %v850 = vunpack.c.l.b16 %v741
      %v851 = vunpack.c.h.b16 %v741
      %v852 = vunpack.c.l.b16 %v742
      %v853 = vunpack.c.h.b16 %v742
      %v854 = vunpack.c.l.b16 %v743
      %v855 = vunpack.c.h.b16 %v743
      %v856 = vunpack.c.l.b16 %v744
      %v857 = vunpack.c.h.b16 %v744
      %v858 = vunpack.c.l.b16 %v745
      %v859 = vunpack.c.h.b16 %v745
      %v860 = vunpack.c.l.b16 %v746
      %v861 = vunpack.c.h.b16 %v746
      %v862 = vunpack.c.l.b16 %v747
      %v863 = vunpack.c.h.b16 %v747
      %v864 = vpack.c.b16 %v802, %v800
      %v865 = vpack.c.b16 %v803, %v801
      %v866 = vpack.c.b16 %v806, %v804
      %v867 = vpack.c.b16 %v807, %v805
      %v868 = vpack.c.b16 %v810, %v808
      %v869 = vpack.c.b16 %v811, %v809
      %v870 = vpack.c.b16 %v814, %v812
      %v871 = vpack.c.b16 %v815, %v813
      %v872 = vpack.c.b16 %v818, %v816
      %v873 = vpack.c.b16 %v819, %v817
      %v874 = vpack.c.b16 %v822, %v820
      %v875 = vpack.c.b16 %v823, %v821
      %v876 = vpack.c.b16 %v826, %v824
      %v877 = vpack.c.b16 %v827, %v825
      %v878 = vpack.c.b16 %v830, %v828
      %v879 = vpack.c.b16 %v831, %v829
      %v880 = vpack.c.b16 %v834, %v832
      %v881 = vpack.c.b16 %v835, %v833
      %v882 = vpack.c.b16 %v838, %v836
      %v883 = vpack.c.b16 %v839, %v837
      %v884 = vpack.c.b16 %v842, %v840
      %v885 = vpack.c.b16 %v843, %v841
      %v886 = vpack.c.b16 %v846, %v844
      %v887 = vpack.c.b16 %v847, %v845
      %v888 = vpack.c.b16 %v850, %v848
      %v889 = vpack.c.b16 %v851, %v849
      %v890 = vpack.c.b16 %v854, %v852
      %v891 = vpack.c.b16 %v855, %v853
      %v892 = vpack.c.b16 %v858, %v856
      %v893 = vpack.c.b16 %v859, %v857
      %v894 = vpack.c.b16 %v862, %v860
      %v895 = vpack.c.b16 %v863, %v861
      %928 = vmatprep.subr.bf16.mxu0 %v865
      %929 = vmatpush1.bf16.msra.mxu0 %v864
      %930 = vmatprep.subr.bf16.mxu0 %v867
      %931 = vmatpush1.bf16.msra.mxu0 %v866
      %932 = vmatprep.subr.bf16.mxu0 %v869
      %933 = vmatpush1.bf16.msra.mxu0 %v868
      %934 = vmatprep.subr.bf16.mxu0 %v871
      %935 = vmatpush1.bf16.msra.mxu0 %v870
      %936 = vmatprep.subr.bf16.mxu0 %v873
      %937 = vmatpush1.bf16.msra.mxu0 %v872
      %938 = vmatprep.subr.bf16.mxu0 %v875
      %939 = vmatpush1.bf16.msra.mxu0 %v874
      %940 = vmatprep.subr.bf16.mxu0 %v877
      %941 = vmatpush1.bf16.msra.mxu0 %v876
      %942 = vmatprep.subr.bf16.mxu0 %v879
      %943 = vmatpush1.bf16.msra.mxu0 %v878
      %944 = vmatprep.subr.bf16.mxu0 %v881
      %945 = vmatpush1.bf16.msra.mxu0 %v880
      %946 = vmatprep.subr.bf16.mxu0 %v883
      %947 = vmatpush1.bf16.msra.mxu0 %v882
      %948 = vmatprep.subr.bf16.mxu0 %v885
      %949 = vmatpush1.bf16.msra.mxu0 %v884
      %950 = vmatprep.subr.bf16.mxu0 %v887
      %951 = vmatpush1.bf16.msra.mxu0 %v886
      %952 = vmatprep.subr.bf16.mxu0 %v889
      %953 = vmatpush1.bf16.msra.mxu0 %v888
      %954 = vmatprep.subr.bf16.mxu0 %v891
      %955 = vmatpush1.bf16.msra.mxu0 %v890
      %956 = vmatprep.subr.bf16.mxu0 %v893
      %957 = vmatpush1.bf16.msra.mxu0 %v892
      %958 = vmatprep.subr.bf16.mxu0 %v895
      %959 = vmatpush1.bf16.msra.mxu0 %v894
      %960 = vmatprep.mubr.bf16.mxu0 %v750
      %961 = vmatmul.mubr.bf16.gmra.mrb[0].mxu0 %v749
      %v962 = vpop.f32.mrb[0].mxu0
      %v963 = vadd.f32 %v761, %v962
      %v964 = vpop.f32.mrb[0].mxu0
      %v965 = vadd.f32 %v765, %v964
      %v966 = vpop.f32.mrb[0].mxu0
      %v967 = vadd.f32 %v761, %v966
      %v968 = vpop.f32.mrb[0].mxu0
      %v969 = vadd.f32 %v765, %v968
      %970 = vmatprep.mubr.bf16.mxu0 %v752
      %971 = vmatmul.mubr.bf16.gmra.mrb[0].mxu0 %v751
      %v972 = vpop.f32.mrb[0].mxu0
      %v973 = vadd.f32 %v761, %v972
      %v974 = vpop.f32.mrb[0].mxu0
      %v975 = vadd.f32 %v765, %v974
      %v976 = vpop.f32.mrb[0].mxu0
      %v977 = vadd.f32 %v761, %v976
      %v978 = vpop.f32.mrb[0].mxu0
      %v979 = vadd.f32 %v765, %v978
      %980 = vmatprep.mubr.bf16.mxu0 %v754
      %981 = vmatmul.mubr.bf16.gmra.mrb[0].mxu0 %v753
      %v982 = vpop.f32.mrb[0].mxu0
      %v983 = vadd.f32 %v761, %v982
      %v984 = vpop.f32.mrb[0].mxu0
      %v985 = vadd.f32 %v765, %v984
      %v986 = vpop.f32.mrb[0].mxu0
      %v987 = vadd.f32 %v761, %v986
      %v988 = vpop.f32.mrb[0].mxu0
      %v989 = vadd.f32 %v765, %v988
      %990 = vmatprep.mubr.bf16.mxu0 %v756
      %991 = vmatmul.mubr.bf16.gmra.mrb[0].mxu0 %v755
      %v992 = vpop.f32.mrb[0].mxu0
      %v993 = vadd.f32 %v761, %v992
      %v994 = vpop.f32.mrb[0].mxu0
      %v995 = vadd.f32 %v765, %v994
      %v996 = vpop.f32.mrb[0].mxu0
      %v997 = vadd.f32 %v761, %v996
      %v998 = vpop.f32.mrb[0].mxu0
      %v999 = vadd.f32 %v765, %v998
      %1000 = vdwg.mxu0
      %v1001 = vpack.c.bf16 %v969, %v965
      %v1002 = vpack.c.bf16 %v979, %v975
      %v1003 = vpack.c.bf16 %v989, %v985
      %v1004 = vpack.c.bf16 %v999, %v995
      %v1013 = vunpack.c.l.b16 %v708
      %v1014 = vunpack.c.l.b16 %v709
      %v1015 = vunpack.c.l.b16 %v710
      %v1016 = vunpack.c.l.b16 %v711
      %v1017 = vunpack.c.l.b16 %v712
      %v1018 = vunpack.c.l.b16 %v713
      %v1019 = vunpack.c.l.b16 %v714
      %v1020 = vunpack.c.l.b16 %v715
      %v1021 = vpack.c.b16 %v1014, %v1013
      %v1022 = vpack.c.b16 %v1016, %v1015
      %v1023 = vpack.c.b16 %v1018, %v1017
      %v1024 = vpack.c.b16 %v1020, %v1019
      %vm1025 = vcmask 523264
      %v1027 = vsel %vm1025, %v1021, 0
      %v1030 = vsel %vm1025, %v1022, 0
      %v1033 = vsel %vm1025, %v1023, 0
      %v1036 = vsel %vm1025, %v1024, 0
      %1038 = vmatprep.subr.bf16.mxu0 0
      %1039 = vmatpush1.bf16.msra.mxu0 %v1001
      %1040 = vmatprep.subr.bf16.mxu0 0
      %1041 = vmatpush1.bf16.msra.mxu0 %v1002
      %1042 = vmatprep.subr.bf16.mxu0 0
      %1043 = vmatpush1.bf16.msra.mxu0 %v1003
      %1044 = vmatprep.subr.bf16.mxu0 0
      %1045 = vmatpush1.bf16.msra.mxu0 %v1004
      %1046 = vmatprep.subr.bf16.mxu0 0
      %1047 = vmatpush1.bf16.msra.mxu0 0
      %1048 = vmatprep.subr.bf16.mxu0 0
      %1049 = vmatpush1.bf16.msra.mxu0 0
      %1050 = vmatprep.subr.bf16.mxu0 0
      %1051 = vmatpush1.bf16.msra.mxu0 0
      %1052 = vmatprep.subr.bf16.mxu0 0
      %1053 = vmatpush1.bf16.msra.mxu0 0
      %1054 = vmatprep.subr.bf16.mxu0 0
      %1055 = vmatpush1.bf16.msra.mxu0 0
      %1056 = vmatprep.subr.bf16.mxu0 0
      %1057 = vmatpush1.bf16.msra.mxu0 0
      %1058 = vmatprep.subr.bf16.mxu0 0
      %1059 = vmatpush1.bf16.msra.mxu0 0
      %1060 = vmatprep.subr.bf16.mxu0 0
      %1061 = vmatpush1.bf16.msra.mxu0 0
      %1062 = vmatprep.subr.bf16.mxu0 0
      %1063 = vmatpush1.bf16.msra.mxu0 0
      %1064 = vmatprep.subr.bf16.mxu0 0
      %1065 = vmatpush1.bf16.msra.mxu0 0
      %1066 = vmatprep.subr.bf16.mxu0 0
      %1067 = vmatpush1.bf16.msra.mxu0 0
      %1068 = vmatprep.subr.bf16.mxu0 0
      %1069 = vmatpush1.bf16.msra.mxu0 0
      %1070 = vmatprep.mubr.bf16.mxu0 0
      %1071 = vmatmul.mubr.bf16.gmra.mrb[0].mxu0 %v1027
      %v1072 = vpop.f32.mrb[0].mxu0
      %v1073 = vadd.f32 0.0, %v1072
      %v1074 = vpop.f32.mrb[0].mxu0
      %v1075 = vpop.f32.mrb[0].mxu0
      %v1076 = vadd.f32 0.0, %v1075
      %v1077 = vpop.f32.mrb[0].mxu0
      %1078 = vmatprep.mubr.bf16.mxu0 0
      %1079 = vmatmul.mubr.bf16.gmra.mrb[0].mxu0 %v1030
      %v1080 = vpop.f32.mrb[0].mxu0
      %v1081 = vadd.f32 0.0, %v1080
      %v1082 = vpop.f32.mrb[0].mxu0
      %v1083 = vpop.f32.mrb[0].mxu0
      %v1084 = vadd.f32 0.0, %v1083
      %v1085 = vpop.f32.mrb[0].mxu0
      %1086 = vmatprep.mubr.bf16.mxu0 0
      %1087 = vmatmul.mubr.bf16.gmra.mrb[0].mxu0 %v1033
      %v1088 = vpop.f32.mrb[0].mxu0
      %v1089 = vadd.f32 0.0, %v1088
      %v1090 = vpop.f32.mrb[0].mxu0
      %v1091 = vpop.f32.mrb[0].mxu0
      %v1092 = vadd.f32 0.0, %v1091
      %v1093 = vpop.f32.mrb[0].mxu0
      %1094 = vmatprep.mubr.bf16.mxu0 0
      %1095 = vmatmul.mubr.bf16.gmra.mrb[0].mxu0 %v1036
      %v1096 = vpop.f32.mrb[0].mxu0
      %v1097 = vadd.f32 0.0, %v1096
      %v1098 = vpop.f32.mrb[0].mxu0
      %v1099 = vpop.f32.mrb[0].mxu0
      %v1100 = vadd.f32 0.0, %v1099
      %v1101 = vpop.f32.mrb[0].mxu0
      %1102 = vdwg.mxu0
      %v1103 = vadd.f32 %v963, %v1073
      %v1104 = vadd.f32 %v967, %v1076
      %v1105 = vadd.f32 %v973, %v1081
      %v1106 = vadd.f32 %v977, %v1084
      %v1107 = vadd.f32 %v983, %v1089
      %v1108 = vadd.f32 %v987, %v1092
      %v1109 = vadd.f32 %v993, %v1097
      %v1110 = vadd.f32 %v997, %v1100
      %v1111 = vmax.f32 %v1103, 0.0
      %v1112 = vmax.f32 %v1104, 0.0
      %v1113 = vmax.f32 %v1105, 0.0
      %v1114 = vmax.f32 %v1106, 0.0
      %v1115 = vmax.f32 %v1107, 0.0
      %v1116 = vmax.f32 %v1108, 0.0
      %v1117 = vmax.f32 %v1109, 0.0
      %v1118 = vmax.f32 %v1110, 0.0
      %v1119 = vpack.c.bf16 %v1112, %v1111
      %v1120 = vpack.c.bf16 %v1114, %v1113
      %v1121 = vpack.c.bf16 %v1116, %v1115
      %v1122 = vpack.c.bf16 %v1118, %v1117
      %1123 = vst [vmem:[#allocation2] sm:$0xff] %v1119
      %1124 = vst [vmem:[#allocation2 + $0x10] sm:$0xff] %v1120
      %1125 = vst [vmem:[#allocation2 + $0x20] sm:$0xff] %v1121
      %1126 = vst [vmem:[#allocation2 + $0x30] sm:$0xff] %v1122
      %v1127 = vld [vmem:[%s7] sm:$0xff]
      %v1128 = vld [vmem:[%s7 + $0x8] sm:$0xff]
      %v1129 = vld [vmem:[%s7 + $0x10] sm:$0xff]
      %v1130 = vld [vmem:[%s7 + $0x18] sm:$0xff]
      %v1131 = vld [vmem:[%s7 + $0x20] sm:$0xff]
      %v1132 = vld [vmem:[%s7 + $0x28] sm:$0xff]
      %v1133 = vld [vmem:[%s7 + $0x30] sm:$0xff]
      %v1134 = vld [vmem:[%s7 + $0x38] sm:$0xff]
      %v1135 = vld [vmem:[%s7 + $0x40] sm:$0xff]
      %v1136 = vld [vmem:[%s7 + $0x48] sm:$0xff]
      %v1137 = vld [vmem:[%s7 + $0x50] sm:$0xff]
      %v1138 = vld [vmem:[%s7 + $0x58] sm:$0xff]
      %v1139 = vld [vmem:[%s7 + $0x60] sm:$0xff]
      %v1140 = vld [vmem:[%s7 + $0x68] sm:$0xff]
      %v1141 = vld [vmem:[%s7 + $0x70] sm:$0xff]
      %v1142 = vld [vmem:[%s7 + $0x78] sm:$0xff]
      %v1143 = vld [vmem:[%s7 + $0x80] sm:$0xff]
      %v1144 = vld [vmem:[%s7 + $0x88] sm:$0xff]
      %v1145 = vld [vmem:[%s7 + $0x90] sm:$0xff]
      %v1146 = vld [vmem:[%s7 + $0x98] sm:$0xff]
      %v1147 = vld [vmem:[%s7 + $0xa0] sm:$0xff]
      %v1148 = vld [vmem:[%s7 + $0xa8] sm:$0xff]
      %v1149 = vld [vmem:[%s7 + $0xb0] sm:$0xff]
      %v1150 = vld [vmem:[%s7 + $0xb8] sm:$0xff]
      %v1151 = vld [vmem:[%s7 + $0xc0] sm:$0xff]
      %v1152 = vld [vmem:[%s7 + $0xc8] sm:$0xff]
      %v1153 = vld [vmem:[%s7 + $0xd0] sm:$0xff]
      %v1154 = vld [vmem:[%s7 + $0xd8] sm:$0xff]
      %v1155 = vld [vmem:[%s7 + $0xe0] sm:$0xff]
      %v1156 = vld [vmem:[%s7 + $0xe8] sm:$0xff]
      %v1157 = vld [vmem:[%s7 + $0xf0] sm:$0xff]
      %v1158 = vld [vmem:[%s7 + $0xf8] sm:$0xff]
      %v1159 = vld [vmem:[%s8] sm:$0x3]
      %v1160 = vld [vmem:[#allocation2] sm:$0xff]
      %v1161 = vld [vmem:[#allocation2 + $0x8] sm:$0xff]
      %v1162 = vld [vmem:[#allocation2 + $0x10] sm:$0xff]
      %v1163 = vld [vmem:[#allocation2 + $0x18] sm:$0xff]
      %v1164 = vld [vmem:[#allocation2 + $0x20] sm:$0xff]
      %v1165 = vld [vmem:[#allocation2 + $0x28] sm:$0xff]
      %v1166 = vld [vmem:[#allocation2 + $0x30] sm:$0xff]
      %v1167 = vld [vmem:[#allocation2 + $0x38] sm:$0xff]
      %v1169 = vlaneseq
      %v1170 = vshrl.u32 %v1169, 7
      %v1171 = vsub.s32 0, %v1170
      %v1172 = vrot.slane %v1159, %v1171
      %v1173 = vlaneseq
      %v1174 = vshrl.u32 %v1173, 7
      %v1175 = vsub.s32 1, %v1174
      %v1176 = vrot.slane %v1159, %v1175
      %v1211 = vunpack.c.l.b16 %v1127
      %v1212 = vunpack.c.h.b16 %v1127
      %v1213 = vunpack.c.l.b16 %v1128
      %v1214 = vunpack.c.h.b16 %v1128
      %v1215 = vunpack.c.l.b16 %v1129
      %v1216 = vunpack.c.h.b16 %v1129
      %v1217 = vunpack.c.l.b16 %v1130
      %v1218 = vunpack.c.h.b16 %v1130
      %v1219 = vunpack.c.l.b16 %v1131
      %v1220 = vunpack.c.h.b16 %v1131
      %v1221 = vunpack.c.l.b16 %v1132
      %v1222 = vunpack.c.h.b16 %v1132
      %v1223 = vunpack.c.l.b16 %v1133
      %v1224 = vunpack.c.h.b16 %v1133
      %v1225 = vunpack.c.l.b16 %v1134
      %v1226 = vunpack.c.h.b16 %v1134
      %v1227 = vunpack.c.l.b16 %v1135
      %v1228 = vunpack.c.h.b16 %v1135
      %v1229 = vunpack.c.l.b16 %v1136
      %v1230 = vunpack.c.h.b16 %v1136
      %v1231 = vunpack.c.l.b16 %v1137
      %v1232 = vunpack.c.h.b16 %v1137
      %v1233 = vunpack.c.l.b16 %v1138
      %v1234 = vunpack.c.h.b16 %v1138
      %v1235 = vunpack.c.l.b16 %v1139
      %v1236 = vunpack.c.h.b16 %v1139
      %v1237 = vunpack.c.l.b16 %v1140
      %v1238 = vunpack.c.h.b16 %v1140
      %v1239 = vunpack.c.l.b16 %v1141
      %v1240 = vunpack.c.h.b16 %v1141
      %v1241 = vunpack.c.l.b16 %v1142
      %v1242 = vunpack.c.h.b16 %v1142
      %v1243 = vunpack.c.l.b16 %v1143
      %v1244 = vunpack.c.h.b16 %v1143
      %v1245 = vunpack.c.l.b16 %v1144
      %v1246 = vunpack.c.h.b16 %v1144
      %v1247 = vunpack.c.l.b16 %v1145
      %v1248 = vunpack.c.h.b16 %v1145
      %v1249 = vunpack.c.l.b16 %v1146
      %v1250 = vunpack.c.h.b16 %v1146
      %v1251 = vunpack.c.l.b16 %v1147
      %v1252 = vunpack.c.h.b16 %v1147
      %v1253 = vunpack.c.l.b16 %v1148
      %v1254 = vunpack.c.h.b16 %v1148
      %v1255 = vunpack.c.l.b16 %v1149
      %v1256 = vunpack.c.h.b16 %v1149
      %v1257 = vunpack.c.l.b16 %v1150
      %v1258 = vunpack.c.h.b16 %v1150
      %v1259 = vunpack.c.l.b16 %v1151
      %v1260 = vunpack.c.h.b16 %v1151
      %v1261 = vunpack.c.l.b16 %v1152
      %v1262 = vunpack.c.h.b16 %v1152
      %v1263 = vunpack.c.l.b16 %v1153
      %v1264 = vunpack.c.h.b16 %v1153
      %v1265 = vunpack.c.l.b16 %v1154
      %v1266 = vunpack.c.h.b16 %v1154
      %v1267 = vunpack.c.l.b16 %v1155
      %v1268 = vunpack.c.h.b16 %v1155
      %v1269 = vunpack.c.l.b16 %v1156
      %v1270 = vunpack.c.h.b16 %v1156
      %v1271 = vunpack.c.l.b16 %v1157
      %v1272 = vunpack.c.h.b16 %v1157
      %v1273 = vunpack.c.l.b16 %v1158
      %v1274 = vunpack.c.h.b16 %v1158
      %v1275 = vpack.c.b16 %v1213, %v1211
      %v1276 = vpack.c.b16 %v1214, %v1212
      %v1277 = vpack.c.b16 %v1217, %v1215
      %v1278 = vpack.c.b16 %v1218, %v1216
      %v1279 = vpack.c.b16 %v1221, %v1219
      %v1280 = vpack.c.b16 %v1222, %v1220
      %v1281 = vpack.c.b16 %v1225, %v1223
      %v1282 = vpack.c.b16 %v1226, %v1224
      %v1283 = vpack.c.b16 %v1229, %v1227
      %v1284 = vpack.c.b16 %v1230, %v1228
      %v1285 = vpack.c.b16 %v1233, %v1231
      %v1286 = vpack.c.b16 %v1234, %v1232
      %v1287 = vpack.c.b16 %v1237, %v1235
      %v1288 = vpack.c.b16 %v1238, %v1236
      %v1289 = vpack.c.b16 %v1241, %v1239
      %v1290 = vpack.c.b16 %v1242, %v1240
      %v1291 = vpack.c.b16 %v1245, %v1243
      %v1292 = vpack.c.b16 %v1246, %v1244
      %v1293 = vpack.c.b16 %v1249, %v1247
      %v1294 = vpack.c.b16 %v1250, %v1248
      %v1295 = vpack.c.b16 %v1253, %v1251
      %v1296 = vpack.c.b16 %v1254, %v1252
      %v1297 = vpack.c.b16 %v1257, %v1255
      %v1298 = vpack.c.b16 %v1258, %v1256
      %v1299 = vpack.c.b16 %v1261, %v1259
      %v1300 = vpack.c.b16 %v1262, %v1260
      %v1301 = vpack.c.b16 %v1265, %v1263
      %v1302 = vpack.c.b16 %v1266, %v1264
      %v1303 = vpack.c.b16 %v1269, %v1267
      %v1304 = vpack.c.b16 %v1270, %v1268
      %v1305 = vpack.c.b16 %v1273, %v1271
      %v1306 = vpack.c.b16 %v1274, %v1272
      %1339 = vmatprep.subr.bf16.mxu0 %v1276
      %1340 = vmatpush1.bf16.msra.mxu0 %v1275
      %1341 = vmatprep.subr.bf16.mxu0 %v1278
      %1342 = vmatpush1.bf16.msra.mxu0 %v1277
      %1343 = vmatprep.subr.bf16.mxu0 %v1280
      %1344 = vmatpush1.bf16.msra.mxu0 %v1279
      %1345 = vmatprep.subr.bf16.mxu0 %v1282
      %1346 = vmatpush1.bf16.msra.mxu0 %v1281
      %1347 = vmatprep.subr.bf16.mxu0 %v1284
      %1348 = vmatpush1.bf16.msra.mxu0 %v1283
      %1349 = vmatprep.subr.bf16.mxu0 %v1286
      %1350 = vmatpush1.bf16.msra.mxu0 %v1285
      %1351 = vmatprep.subr.bf16.mxu0 %v1288
      %1352 = vmatpush1.bf16.msra.mxu0 %v1287
      %1353 = vmatprep.subr.bf16.mxu0 %v1290
      %1354 = vmatpush1.bf16.msra.mxu0 %v1289
      %1355 = vmatprep.subr.bf16.mxu0 %v1292
      %1356 = vmatpush1.bf16.msra.mxu0 %v1291
      %1357 = vmatprep.subr.bf16.mxu0 %v1294
      %1358 = vmatpush1.bf16.msra.mxu0 %v1293
      %1359 = vmatprep.subr.bf16.mxu0 %v1296
      %1360 = vmatpush1.bf16.msra.mxu0 %v1295
      %1361 = vmatprep.subr.bf16.mxu0 %v1298
      %1362 = vmatpush1.bf16.msra.mxu0 %v1297
      %1363 = vmatprep.subr.bf16.mxu0 %v1300
      %1364 = vmatpush1.bf16.msra.mxu0 %v1299
      %1365 = vmatprep.subr.bf16.mxu0 %v1302
      %1366 = vmatpush1.bf16.msra.mxu0 %v1301
      %1367 = vmatprep.subr.bf16.mxu0 %v1304
      %1368 = vmatpush1.bf16.msra.mxu0 %v1303
      %1369 = vmatprep.subr.bf16.mxu0 %v1306
      %1370 = vmatpush1.bf16.msra.mxu0 %v1305
      %1371 = vmatprep.mubr.bf16.mxu0 %v1161
      %1372 = vmatmul.mubr.bf16.gmra.mrb[0].mxu0 %v1160
      %v1373 = vpop.f32.mrb[0].mxu0
      %v1374 = vadd.f32 %v1172, %v1373
      %v1375 = vpop.f32.mrb[0].mxu0
      %v1376 = vadd.f32 %v1176, %v1375
      %v1377 = vpop.f32.mrb[0].mxu0
      %v1378 = vadd.f32 %v1172, %v1377
      %v1379 = vpop.f32.mrb[0].mxu0
      %v1380 = vadd.f32 %v1176, %v1379
      %1381 = vmatprep.mubr.bf16.mxu0 %v1163
      %1382 = vmatmul.mubr.bf16.gmra.mrb[0].mxu0 %v1162
      %v1383 = vpop.f32.mrb[0].mxu0
      %v1384 = vadd.f32 %v1172, %v1383
      %v1385 = vpop.f32.mrb[0].mxu0
      %v1386 = vadd.f32 %v1176, %v1385
      %v1387 = vpop.f32.mrb[0].mxu0
      %v1388 = vadd.f32 %v1172, %v1387
      %v1389 = vpop.f32.mrb[0].mxu0
      %v1390 = vadd.f32 %v1176, %v1389
      %1391 = vmatprep.mubr.bf16.mxu0 %v1165
      %1392 = vmatmul.mubr.bf16.gmra.mrb[0].mxu0 %v1164
      %v1393 = vpop.f32.mrb[0].mxu0
      %v1394 = vadd.f32 %v1172, %v1393
      %v1395 = vpop.f32.mrb[0].mxu0
      %v1396 = vadd.f32 %v1176, %v1395
      %v1397 = vpop.f32.mrb[0].mxu0
      %v1398 = vadd.f32 %v1172, %v1397
      %v1399 = vpop.f32.mrb[0].mxu0
      %v1400 = vadd.f32 %v1176, %v1399
      %1401 = vmatprep.mubr.bf16.mxu0 %v1167
      %1402 = vmatmul.mubr.bf16.gmra.mrb[0].mxu0 %v1166
      %v1403 = vpop.f32.mrb[0].mxu0
      %v1404 = vadd.f32 %v1172, %v1403
      %v1405 = vpop.f32.mrb[0].mxu0
      %v1406 = vadd.f32 %v1176, %v1405
      %v1407 = vpop.f32.mrb[0].mxu0
      %v1408 = vadd.f32 %v1172, %v1407
      %v1409 = vpop.f32.mrb[0].mxu0
      %v1410 = vadd.f32 %v1176, %v1409
      %1411 = vdwg.mxu0
      %v1412 = vpack.c.bf16 %v1380, %v1376
      %v1413 = vpack.c.bf16 %v1390, %v1386
      %v1414 = vpack.c.bf16 %v1400, %v1396
      %v1415 = vpack.c.bf16 %v1410, %v1406
      %1416 = vmatprep.subr.bf16.mxu0 0
      %1417 = vmatpush1.bf16.msra.mxu0 %v1412
      %1418 = vmatprep.subr.bf16.mxu0 0
      %1419 = vmatpush1.bf16.msra.mxu0 %v1413
      %1420 = vmatprep.subr.bf16.mxu0 0
      %1421 = vmatpush1.bf16.msra.mxu0 %v1414
      %1422 = vmatprep.subr.bf16.mxu0 0
      %1423 = vmatpush1.bf16.msra.mxu0 %v1415
      %1424 = vmatprep.subr.bf16.mxu0 0
      %1425 = vmatpush1.bf16.msra.mxu0 0
      %1426 = vmatprep.subr.bf16.mxu0 0
      %1427 = vmatpush1.bf16.msra.mxu0 0
      %1428 = vmatprep.subr.bf16.mxu0 0
      %1429 = vmatpush1.bf16.msra.mxu0 0
      %1430 = vmatprep.subr.bf16.mxu0 0
      %1431 = vmatpush1.bf16.msra.mxu0 0
      %1432 = vmatprep.subr.bf16.mxu0 0
      %1433 = vmatpush1.bf16.msra.mxu0 0
      %1434 = vmatprep.subr.bf16.mxu0 0
      %1435 = vmatpush1.bf16.msra.mxu0 0
      %1436 = vmatprep.subr.bf16.mxu0 0
      %1437 = vmatpush1.bf16.msra.mxu0 0
      %1438 = vmatprep.subr.bf16.mxu0 0
      %1439 = vmatpush1.bf16.msra.mxu0 0
      %1440 = vmatprep.subr.bf16.mxu0 0
      %1441 = vmatpush1.bf16.msra.mxu0 0
      %1442 = vmatprep.subr.bf16.mxu0 0
      %1443 = vmatpush1.bf16.msra.mxu0 0
      %1444 = vmatprep.subr.bf16.mxu0 0
      %1445 = vmatpush1.bf16.msra.mxu0 0
      %1446 = vmatprep.subr.bf16.mxu0 0
      %1447 = vmatpush1.bf16.msra.mxu0 0
      %1448 = vmatprep.mubr.bf16.mxu0 0
      %1449 = vmatmul.mubr.bf16.gmra.mrb[0].mxu0 %v1027
      %v1450 = vpop.f32.mrb[0].mxu0
      %v1451 = vadd.f32 0.0, %v1450
      %v1452 = vpop.f32.mrb[0].mxu0
      %v1453 = vpop.f32.mrb[0].mxu0
      %v1454 = vadd.f32 0.0, %v1453
      %v1455 = vpop.f32.mrb[0].mxu0
      %1456 = vmatprep.mubr.bf16.mxu0 0
      %1457 = vmatmul.mubr.bf16.gmra.mrb[0].mxu0 %v1030
      %v1458 = vpop.f32.mrb[0].mxu0
      %v1459 = vadd.f32 0.0, %v1458
      %v1460 = vpop.f32.mrb[0].mxu0
      %v1461 = vpop.f32.mrb[0].mxu0
      %v1462 = vadd.f32 0.0, %v1461
      %v1463 = vpop.f32.mrb[0].mxu0
      %1464 = vmatprep.mubr.bf16.mxu0 0
      %1465 = vmatmul.mubr.bf16.gmra.mrb[0].mxu0 %v1033
      %v1466 = vpop.f32.mrb[0].mxu0
      %v1467 = vadd.f32 0.0, %v1466
      %v1468 = vpop.f32.mrb[0].mxu0
      %v1469 = vpop.f32.mrb[0].mxu0
      %v1470 = vadd.f32 0.0, %v1469
      %v1471 = vpop.f32.mrb[0].mxu0
      %1472 = vmatprep.mubr.bf16.mxu0 0
      %1473 = vmatmul.mubr.bf16.gmra.mrb[0].mxu0 %v1036
      %v1474 = vpop.f32.mrb[0].mxu0
      %v1475 = vadd.f32 0.0, %v1474
      %v1476 = vpop.f32.mrb[0].mxu0
      %v1477 = vpop.f32.mrb[0].mxu0
      %v1478 = vadd.f32 0.0, %v1477
      %v1479 = vpop.f32.mrb[0].mxu0
      %1480 = vdwg.mxu0
      %v1481 = vadd.f32 %v1374, %v1451
      %v1482 = vadd.f32 %v1378, %v1454
      %v1483 = vadd.f32 %v1384, %v1459
      %v1484 = vadd.f32 %v1388, %v1462
      %v1485 = vadd.f32 %v1394, %v1467
      %v1486 = vadd.f32 %v1398, %v1470
      %v1487 = vadd.f32 %v1404, %v1475
      %v1488 = vadd.f32 %v1408, %v1478
      %v1489 = vmax.f32 %v1481, 0.0
      %v1490 = vmax.f32 %v1482, 0.0
      %v1491 = vmax.f32 %v1483, 0.0
      %v1492 = vmax.f32 %v1484, 0.0
      %v1493 = vmax.f32 %v1485, 0.0
      %v1494 = vmax.f32 %v1486, 0.0
      %v1495 = vmax.f32 %v1487, 0.0
      %v1496 = vmax.f32 %v1488, 0.0
      %v1497 = vpack.c.bf16 %v1490, %v1489
      %v1498 = vpack.c.bf16 %v1492, %v1491
      %v1499 = vpack.c.bf16 %v1494, %v1493
      %v1500 = vpack.c.bf16 %v1496, %v1495
      %1501 = vst [vmem:[#allocation2] sm:$0xff] %v1497
      %1502 = vst [vmem:[#allocation2 + $0x10] sm:$0xff] %v1498
      %1503 = vst [vmem:[#allocation2 + $0x20] sm:$0xff] %v1499
      %1504 = vst [vmem:[#allocation2 + $0x30] sm:$0xff] %v1500
      %v1505 = vld [vmem:[#allocation2] sm:$0xff]
      %v1506 = vld [vmem:[#allocation2 + $0x8] sm:$0xff]
      %v1507 = vld [vmem:[#allocation2 + $0x10] sm:$0xff]
      %v1508 = vld [vmem:[#allocation2 + $0x18] sm:$0xff]
      %v1509 = vld [vmem:[#allocation2 + $0x20] sm:$0xff]
      %v1510 = vld [vmem:[#allocation2 + $0x28] sm:$0xff]
      %v1511 = vld [vmem:[#allocation2 + $0x30] sm:$0xff]
      %v1512 = vld [vmem:[#allocation2 + $0x38] sm:$0xff]
      %v1513 = vld [vmem:[%s9] sm:$0xf]
      %v1514 = vld [vmem:[%s9 + $0x4] sm:$0xf]
      %v1515 = vld [vmem:[%s9 + $0x8] sm:$0xf]
      %v1516 = vld [vmem:[%s9 + $0xc] sm:$0xf]
      %v1517 = vld [vmem:[%s9 + $0x10] sm:$0xf]
      %v1518 = vld [vmem:[%s9 + $0x14] sm:$0xf]
      %v1519 = vld [vmem:[%s9 + $0x18] sm:$0xf]
      %v1520 = vld [vmem:[%s9 + $0x1c] sm:$0xf]
      %v1521 = vld [vmem:[%s9 + $0x20] sm:$0xf]
      %v1522 = vld [vmem:[%s9 + $0x24] sm:$0xf]
      %v1523 = vld [vmem:[%s9 + $0x28] sm:$0xf]
      %v1524 = vld [vmem:[%s9 + $0x2c] sm:$0xf]
      %v1525 = vld [vmem:[%s9 + $0x30] sm:$0xf]
      %v1526 = vld [vmem:[%s9 + $0x34] sm:$0xf]
      %v1527 = vld [vmem:[%s9 + $0x38] sm:$0xf]
      %v1528 = vld [vmem:[%s9 + $0x3c] sm:$0xf]
      %v1529 = vld [vmem:[%s9 + $0x40] sm:$0xf]
      %v1530 = vld [vmem:[%s9 + $0x44] sm:$0xf]
      %v1531 = vld [vmem:[%s9 + $0x48] sm:$0xf]
      %v1532 = vld [vmem:[%s9 + $0x4c] sm:$0xf]
      %v1533 = vld [vmem:[%s9 + $0x50] sm:$0xf]
      %v1534 = vld [vmem:[%s9 + $0x54] sm:$0xf]
      %v1535 = vld [vmem:[%s9 + $0x58] sm:$0xf]
      %v1536 = vld [vmem:[%s9 + $0x5c] sm:$0xf]
      %v1537 = vld [vmem:[%s9 + $0x60] sm:$0xf]
      %v1538 = vld [vmem:[%s9 + $0x64] sm:$0xf]
      %v1539 = vld [vmem:[%s9 + $0x68] sm:$0xf]
      %v1540 = vld [vmem:[%s9 + $0x6c] sm:$0xf]
      %v1541 = vld [vmem:[%s9 + $0x70] sm:$0xf]
      %v1542 = vld [vmem:[%s9 + $0x74] sm:$0xf]
      %v1543 = vld [vmem:[%s9 + $0x78] sm:$0xf]
      %v1544 = vld [vmem:[%s9 + $0x7c] sm:$0xf]
      %v1545 = vld [vmem:[%s10] sm:$0x1]
      %v1547 = vlaneseq
      %v1548 = vshrl.u32 %v1547, 7
      %v1549 = vsub.s32 0, %v1548
      %v1550 = vrot.slane %v1545, %v1549
      %v1584 = vunpack.c.l.b16 %v1513
      %v1585 = vunpack.c.l.b16 %v1514
      %v1586 = vunpack.c.l.b16 %v1515
      %v1587 = vunpack.c.l.b16 %v1516
      %v1588 = vunpack.c.l.b16 %v1517
      %v1589 = vunpack.c.l.b16 %v1518
      %v1590 = vunpack.c.l.b16 %v1519
      %v1591 = vunpack.c.l.b16 %v1520
      %v1592 = vunpack.c.l.b16 %v1521
      %v1593 = vunpack.c.l.b16 %v1522
      %v1594 = vunpack.c.l.b16 %v1523
      %v1595 = vunpack.c.l.b16 %v1524
      %v1596 = vunpack.c.l.b16 %v1525
      %v1597 = vunpack.c.l.b16 %v1526
      %v1598 = vunpack.c.l.b16 %v1527
      %v1599 = vunpack.c.l.b16 %v1528
      %v1600 = vunpack.c.l.b16 %v1529
      %v1601 = vunpack.c.l.b16 %v1530
      %v1602 = vunpack.c.l.b16 %v1531
      %v1603 = vunpack.c.l.b16 %v1532
      %v1604 = vunpack.c.l.b16 %v1533
      %v1605 = vunpack.c.l.b16 %v1534
      %v1606 = vunpack.c.l.b16 %v1535
      %v1607 = vunpack.c.l.b16 %v1536
      %v1608 = vunpack.c.l.b16 %v1537
      %v1609 = vunpack.c.l.b16 %v1538
      %v1610 = vunpack.c.l.b16 %v1539
      %v1611 = vunpack.c.l.b16 %v1540
      %v1612 = vunpack.c.l.b16 %v1541
      %v1613 = vunpack.c.l.b16 %v1542
      %v1614 = vunpack.c.l.b16 %v1543
      %v1615 = vunpack.c.l.b16 %v1544
      %v1616 = vpack.c.b16 %v1585, %v1584
      %v1617 = vpack.c.b16 %v1587, %v1586
      %v1618 = vpack.c.b16 %v1589, %v1588
      %v1619 = vpack.c.b16 %v1591, %v1590
      %v1620 = vpack.c.b16 %v1593, %v1592
      %v1621 = vpack.c.b16 %v1595, %v1594
      %v1622 = vpack.c.b16 %v1597, %v1596
      %v1623 = vpack.c.b16 %v1599, %v1598
      %v1624 = vpack.c.b16 %v1601, %v1600
      %v1625 = vpack.c.b16 %v1603, %v1602
      %v1626 = vpack.c.b16 %v1605, %v1604
      %v1627 = vpack.c.b16 %v1607, %v1606
      %v1628 = vpack.c.b16 %v1609, %v1608
      %v1629 = vpack.c.b16 %v1611, %v1610
      %v1630 = vpack.c.b16 %v1613, %v1612
      %v1631 = vpack.c.b16 %v1615, %v1614
      %1648 = vmatprep.subr.bf16.mxu0 0
      %1649 = vmatpush1.bf16.msra.mxu0 %v1616
      %1650 = vmatprep.subr.bf16.mxu0 0
      %1651 = vmatpush1.bf16.msra.mxu0 %v1617
      %1652 = vmatprep.subr.bf16.mxu0 0
      %1653 = vmatpush1.bf16.msra.mxu0 %v1618
      %1654 = vmatprep.subr.bf16.mxu0 0
      %1655 = vmatpush1.bf16.msra.mxu0 %v1619
      %1656 = vmatprep.subr.bf16.mxu0 0
      %1657 = vmatpush1.bf16.msra.mxu0 %v1620
      %1658 = vmatprep.subr.bf16.mxu0 0
      %1659 = vmatpush1.bf16.msra.mxu0 %v1621
      %1660 = vmatprep.subr.bf16.mxu0 0
      %1661 = vmatpush1.bf16.msra.mxu0 %v1622
      %1662 = vmatprep.subr.bf16.mxu0 0
      %1663 = vmatpush1.bf16.msra.mxu0 %v1623
      %1664 = vmatprep.subr.bf16.mxu0 0
      %1665 = vmatpush1.bf16.msra.mxu0 %v1624
      %1666 = vmatprep.subr.bf16.mxu0 0
      %1667 = vmatpush1.bf16.msra.mxu0 %v1625
      %1668 = vmatprep.subr.bf16.mxu0 0
      %1669 = vmatpush1.bf16.msra.mxu0 %v1626
      %1670 = vmatprep.subr.bf16.mxu0 0
      %1671 = vmatpush1.bf16.msra.mxu0 %v1627
      %1672 = vmatprep.subr.bf16.mxu0 0
      %1673 = vmatpush1.bf16.msra.mxu0 %v1628
      %1674 = vmatprep.subr.bf16.mxu0 0
      %1675 = vmatpush1.bf16.msra.mxu0 %v1629
      %1676 = vmatprep.subr.bf16.mxu0 0
      %1677 = vmatpush1.bf16.msra.mxu0 %v1630
      %1678 = vmatprep.subr.bf16.mxu0 0
      %1679 = vmatpush1.bf16.msra.mxu0 %v1631
      %1680 = vmatprep.mubr.bf16.mxu0 %v1506
      %1681 = vmatmul.mubr.bf16.gmra.mrb[0].mxu0 %v1505
      %v1682 = vpop.f32.mrb[0].mxu0
      %v1683 = vadd.f32 %v1550, %v1682
      %v1684 = vpop.f32.mrb[0].mxu0
      %v1685 = vpop.f32.mrb[0].mxu0
      %v1686 = vadd.f32 %v1550, %v1685
      %v1687 = vpop.f32.mrb[0].mxu0
      %1688 = vmatprep.mubr.bf16.mxu0 %v1508
      %1689 = vmatmul.mubr.bf16.gmra.mrb[0].mxu0 %v1507
      %v1690 = vpop.f32.mrb[0].mxu0
      %v1691 = vadd.f32 %v1550, %v1690
      %v1692 = vpop.f32.mrb[0].mxu0
      %v1693 = vpop.f32.mrb[0].mxu0
      %v1694 = vadd.f32 %v1550, %v1693
      %v1695 = vpop.f32.mrb[0].mxu0
      %1696 = vmatprep.mubr.bf16.mxu0 %v1510
      %1697 = vmatmul.mubr.bf16.gmra.mrb[0].mxu0 %v1509
      %v1698 = vpop.f32.mrb[0].mxu0
      %v1699 = vadd.f32 %v1550, %v1698
      %v1700 = vpop.f32.mrb[0].mxu0
      %v1701 = vpop.f32.mrb[0].mxu0
      %v1702 = vadd.f32 %v1550, %v1701
      %v1703 = vpop.f32.mrb[0].mxu0
      %1704 = vmatprep.mubr.bf16.mxu0 %v1512
      %1705 = vmatmul.mubr.bf16.gmra.mrb[0].mxu0 %v1511
      %v1706 = vpop.f32.mrb[0].mxu0
      %v1707 = vadd.f32 %v1550, %v1706
      %v1708 = vpop.f32.mrb[0].mxu0
      %v1709 = vpop.f32.mrb[0].mxu0
      %v1710 = vadd.f32 %v1550, %v1709
      %v1711 = vpop.f32.mrb[0].mxu0
      %1712 = vdwg.mxu0
      %1713 = vst [vmem:[%s461] sm:$0xff] %v1683
      %1714 = vst [vmem:[%s461 + $0x8] sm:$0xff] %v1686
      %1715 = vst [vmem:[%s461 + $0x10] sm:$0xff] %v1691
      %1716 = vst [vmem:[%s461 + $0x18] sm:$0xff] %v1694
      %1717 = vst [vmem:[%s461 + $0x20] sm:$0xff] %v1699
      %1718 = vst [vmem:[%s461 + $0x28] sm:$0xff] %v1702
      %1719 = vst [vmem:[%s461 + $0x30] sm:$0xff] %v1707
      %1720 = vst [vmem:[%s461 + $0x38] sm:$0xff] %v1710
      %1721 = vst [vmem:[%s466] sm:$0xff] %v1489
      %1722 = vst [vmem:[%s466 + $0x8] sm:$0xff] %v1490
      %1723 = vst [vmem:[%s466 + $0x10] sm:$0xff] %v1491
      %1724 = vst [vmem:[%s466 + $0x18] sm:$0xff] %v1492
      %1725 = vst [vmem:[%s466 + $0x20] sm:$0xff] %v1493
      %1726 = vst [vmem:[%s466 + $0x28] sm:$0xff] %v1494
      %1727 = vst [vmem:[%s466 + $0x30] sm:$0xff] %v1495
      %1728 = vst [vmem:[%s466 + $0x38] sm:$0xff] %v1496
      %p1729 = scmp.lt.s32.totalorder %s24, 1
      %s1730 = scalar_select %p1729, %s24, 1
      %s1731 = smul.addr %s1730, 8
      %s1732 = smul.addr %s1731, 8
      %s1733 = scalar_lea.vmem %s11, %s1732
      %p1734 = scmp.lt.s32.totalorder %s24, 1
      %s1735 = scalar_select %p1734, %s24, 1
      %s1736 = smul.addr %s1735, 8
      %s1737 = smul.addr %s1736, 8
      %s1738 = scalar_lea.vmem %s12, %s1737
      // Predicated region
      $region65: #{mesh_sem_refinement_stage_forward.1} parent=63 // pred_check
        %p1739 = pneg %p288
      $region66: #{mesh_sem_refinement_stage_forward.1} parent=63 // pred_check_branch
        %1741 = sbr.rel (%p1739) target = $region68
      $region67: #{mesh_sem_refinement_stage_forward.1} parent=63 // pred_region
        _
      $region68: #{mesh_sem_refinement_stage_forward.1} parent=63 // pred_fallthru
        _
      // Predicated region
      $region69: #{mesh_sem_refinement_stage_forward.1} parent=63 // pred_check
        %p1742 = pneg %p314
      $region70: #{mesh_sem_refinement_stage_forward.1} parent=63 // pred_check_branch
        %1744 = sbr.rel (%p1742) target = $region72
      $region71: #{mesh_sem_refinement_stage_forward.1} parent=63 // pred_region
        _
      $region72: #{mesh_sem_refinement_stage_forward.1} parent=63 // pred_fallthru
        _
    $region64: #{mesh_sem_refinement_stage_forward.1} parent=5 // pred_fallthru
      _
    %p1745 = scmp.le.s32.totalorder 2, %s19
    // Predicated region
    $region73: #{mesh_sem_refinement_stage_forward.1} parent=5 // pred_check
      %p1746 = pneg %p1745
    $region74: #{mesh_sem_refinement_stage_forward.1} parent=5 // pred_check_branch
      %1748 = sbr.rel (%p1746) target = $region76
    $region75: #{mesh_sem_refinement_stage_forward.1} parent=5 // pred_region
      %s1749 = ssub.s32 %s19, 2
      // Predicated region
      $region77: #{mesh_sem_refinement_stage_forward.1} parent=75 // pred_check
        %p1750 = pneg %p294
      $region78: #{mesh_sem_refinement_stage_forward.1} parent=75 // pred_check_branch
        %1752 = sbr.rel (%p1750) target = $region80
      $region79: #{mesh_sem_refinement_stage_forward.1} parent=75 // pred_region
        %p1753 = scmp.lt.s32.totalorder %s25, 1
        %s1754 = scalar_select %p1753, %s25, 1
        %s1755 = smul.addr %s1754, 8
        %s1756 = smul.addr %s1755, 8
        %s1757 = scalar_lea.vmem %s11, %s1756
      $region80: #{mesh_sem_refinement_stage_forward.1} parent=75 // pred_fallthru
        _
      // Predicated region
      $region81: #{mesh_sem_refinement_stage_forward.1} parent=75 // pred_check
        %p1758 = pneg %p320
      $region82: #{mesh_sem_refinement_stage_forward.1} parent=75 // pred_check_branch
        %1760 = sbr.rel (%p1758) target = $region84
      $region83: #{mesh_sem_refinement_stage_forward.1} parent=75 // pred_region
        %p1761 = scmp.lt.s32.totalorder %s25, 1
        %s1762 = scalar_select %p1761, %s25, 1
        %s1763 = smul.addr %s1762, 8
        %s1764 = smul.addr %s1763, 8
        %s1765 = scalar_lea.vmem %s12, %s1764
      $region84: #{mesh_sem_refinement_stage_forward.1} parent=75 // pred_fallthru
        _
    $region76: #{mesh_sem_refinement_stage_forward.1} parent=5 // pred_fallthru
      _
  $region6: #{mesh_sem_refinement_stage_forward.1} parent=0 // loop_footer
    %s23 = sadd.s32 1, %s19
  $region7: #{mesh_sem_refinement_stage_forward.1} parent=0 // loop_footer_branch
    %18 = sbr.rel target = $region3
  $region8: #{mesh_sem_refinement_stage_forward.1} parent=0 // loop_exit
    _

</llo_original>
